<compile_context>
chip_gen: v6e
topology: v6e:2x2x1
jax: 0.10.0
libtpu: 0.0.40
codegen_flags: <defaults>
</compile_context>

<pallas_src>
import functools

import jax
import jax.numpy as jnp
from jax import lax
from jax.experimental import pallas as pl
from jax.experimental.pallas import tpu as pltpu

M = 32                  # hidden width "m" in the module
C_IN = 3                # input point features (RGB)
C_OUT = 20              # Linear(m, 20)
BLOCK_REPS = 2          # residual blocks at level 0
SUB = 512               # lanes per in-register sub-chunk (avoids vreg spills)
MAX_SUBS_PER_TILE = 4   # TILE_N up to 4 * 512 = 2048 lanes per grid step

# Packed BN parameter layout (bn array, shape (8, M, 1)):
#   0: gres[0]  (block0, first BN gamma)    3: bres[0]  (block0, first BN beta)
#   1: gres[2]  (block1, first BN gamma)    4: bres[2]  (block1, first BN beta)
#   2: gfin                                 5: bres[1]  (block0, second BN beta)
#                                           6: bres[3]  (block1, second BN beta)
#                                           7: bfin


def unet_pointwise_kernel(x_ref, wsub_ref, wres_ref, bn_ref, wlin_ref,
                          blin_ref, o_ref, *, subs_per_tile):
    # Hoist all weight / BN parameter loads out of the sub-chunk loop (JAX does
    # not CSE these re-loads/broadcasts inside an unrolled body).
    wsub = wsub_ref[...]                                   # (M, 3)   bf16
    wres = [wres_ref[i] for i in range(2 * BLOCK_REPS)]    # (M, M)   bf16 each
    bn = [bn_ref[i] for i in range(8)]                     # (M, 1)   f32  each
    wlin = wlin_ref[...]                                   # (20, M)  bf16
    blin = blin_ref[...]                                   # (20, 1)  f32

    def body(j, carry):
        start = pl.multiple_of(j * SUB, SUB)
        x = x_ref[:, pl.ds(start, SUB)]                    # (3, SUB) bf16

        # SubmanifoldConvolution(3, 32, 3, bias=False) — center tap.
        h = jnp.dot(wsub, x, preferred_element_type=jnp.float32)  # (32, SUB)

        # block_reps=2 residual blocks: BN-ReLU, Conv, BN-ReLU, Conv + identity.
        # The second BN's gamma is pre-folded into wres[2b]; its beta is bn[5+b].
        for b in range(BLOCK_REPS):
            h0 = h
            t = jnp.maximum(h * bn[b] + bn[3 + b], 0.0)
            t = jnp.dot(wres[2 * b], t.astype(jnp.bfloat16),
                        preferred_element_type=jnp.float32)
            t = jnp.maximum(t + bn[5 + b], 0.0)
            t = jnp.dot(wres[2 * b + 1], t.astype(jnp.bfloat16),
                        preferred_element_type=jnp.float32)
            h = h0 + t

        # Final BatchNormReLU(m).
        h = jnp.maximum(h * bn[2] + bn[7], 0.0)

        # Linear(m, 20) + bias; store in bf16 (halves HBM writeback).
        # NOTE: 20 output rows -> the last sublane group of the store is
        # masked; padding C_OUT to 32 was measured as low-priority/neutral.
        out = jnp.dot(wlin, h.astype(jnp.bfloat16),
                      preferred_element_type=jnp.float32) + blin
        o_ref[:, pl.ds(start, SUB)] = out.astype(o_ref.dtype)
        return carry

    lax.fori_loop(0, subs_per_tile, body, 0, unroll=True)


def _prepare_params(p):
    """Transpose weights to (out, in) column-vector form, fold each residual
    block's second BN gamma into the preceding conv, cast matmul operands to
    bf16, and pack all per-channel BN params into a single (8, M, 1) array."""
    wres_t = []
    for b in range(BLOCK_REPS):
        g1 = p["gres"][2 * b + 1].reshape(M, 1)                        # (M, 1)
        wres_t.append((p["wres"][2 * b].T * g1).astype(jnp.bfloat16))  # folded
        wres_t.append(p["wres"][2 * b + 1].T.astype(jnp.bfloat16))
    wres_t = jnp.stack(wres_t)                                         # (4, M, M)

    col = lambda v: v.reshape(-1, 1).astype(jnp.float32)
    bn = jnp.stack([
        col(p["gres"][0]), col(p["gres"][2]), col(p["gfin"]),
        col(p["bres"][0]), col(p["bres"][2]),
        col(p["bres"][1]), col(p["bres"][3]), col(p["bfin"]),
    ])                                                                 # (8, M, 1)

    return {
        "wsub_t": p["wsub"].T.astype(jnp.bfloat16),                    # (M, 3)
        "wres_t": wres_t,                                              # (4, M, M)
        "bn": bn,                                                      # (8, M, 1)
        "wlin_t": p["wlin"].T.astype(jnp.bfloat16),                    # (20, M)
        "blin": p["blin"].reshape(C_OUT, 1).astype(jnp.float32),       # (20, 1)
    }


def naive_unet_forward(x, params):
    """x: (N, 3) float32 point features. Returns (N, 20) bf16 logits."""
    n = x.shape[0]
    p = _prepare_params(params)

    n_sub = int(pl.cdiv(n, SUB))
    # Keep the grid >= 2 steps when possible so v7x's two TensorCores both get
    # work along the "parallel" axis; cap TILE_N at MAX_SUBS_PER_TILE * SUB.
    if n_sub >= 2:
        subs_per_tile = max(1, min(MAX_SUBS_PER_TILE, n_sub // 2))
    else:
        subs_per_tile = 1
    n_sub_pad = int(pl.cdiv(n_sub, subs_per_tile)) * subs_per_tile
    n_pad = n_sub_pad * SUB
    tile_n = subs_per_tile * SUB
    grid = (n_sub_pad // subs_per_tile,)

    # Pad the ragged tail and transpose once, in bf16 (channels on sublanes,
    # points on lanes).  Input stream is tiny (6 B/point).
    x_t = jnp.pad(x.astype(jnp.bfloat16), ((0, n_pad - n), (0, 0))).T  # (3, n_pad)

    full = lambda shape: pl.BlockSpec(shape, lambda i: (0,) * len(shape))

    out_t = pl.pallas_call(
        functools.partial(unet_pointwise_kernel, subs_per_tile=subs_per_tile),
        out_shape=jax.ShapeDtypeStruct((C_OUT, n_pad), jnp.bfloat16),
        grid_spec=pltpu.PrefetchScalarGridSpec(
            num_scalar_prefetch=0,
            grid=grid,
            in_specs=[
                pl.BlockSpec((C_IN, tile_n), lambda i: (0, i)),  # x tile
                full((M, C_IN)),                                 # wsub_t
                full((2 * BLOCK_REPS, M, M)),                    # wres_t (folded)
                full((8, M, 1)),                                 # packed BN params
                full((C_OUT, M)),                                # wlin_t
                full((C_OUT, 1)),                                # blin
            ],
            out_specs=pl.BlockSpec((C_OUT, tile_n), lambda i: (0, i)),
        ),
        compiler_params=pltpu.CompilerParams(
            dimension_semantics=("parallel",)),
    )(x_t, p["wsub_t"], p["wres_t"], p["bn"], p["wlin_t"], p["blin"])

    # Slice the pad, transpose in bf16 (half the bytes of an f32 transpose).
    # Returned logits are bf16; up-cast downstream only if needed.
    return out_t[:, :n].T


def init_params(key):
    ks = jax.random.split(key, 8)
    scale = 0.1
    return {
        "wsub": scale * jax.random.normal(ks[0], (C_IN, M), jnp.float32),
        "wres": scale * jax.random.normal(ks[1], (2 * BLOCK_REPS, M, M), jnp.float32),
        # Non-trivial BN affine params so the gamma-folding path is exercised
        # (running mean=0, var=1 deterministically).
        "gres": 0.5 + jax.random.uniform(ks[2], (2 * BLOCK_REPS, 1, M), jnp.float32),
        "bres": scale * jax.random.normal(ks[3], (2 * BLOCK_REPS, 1, M), jnp.float32),
        "gfin": 0.5 + jax.random.uniform(ks[4], (1, M), jnp.float32),
        "bfin": scale * jax.random.normal(ks[5], (1, M), jnp.float32),
        "wlin": scale * jax.random.normal(ks[6], (M, C_OUT), jnp.float32),
        "blin": scale * jax.random.normal(ks[7], (1, C_OUT), jnp.float32),
    }


def reference_forward(x, p):
    """Pure-JAX reference of the same per-point pipeline (bf16 matmul operands,
    f32 accumulation — matches the kernel's numerics, no folding applied)."""
    bf = jnp.bfloat16
    mm = lambda a, b: jnp.dot(a.astype(bf), b.astype(bf),
                              preferred_element_type=jnp.float32)
    h = mm(x, p["wsub"])
    for b in range(BLOCK_REPS):
        h0 = h
        t = jnp.maximum(h * p["gres"][2 * b] + p["bres"][2 * b], 0.0)
        t = mm(t, p["wres"][2 * b])
        t = jnp.maximum(t * p["gres"][2 * b + 1] + p["bres"][2 * b + 1], 0.0)
        t = mm(t, p["wres"][2 * b + 1])
        h = h0 + t
    h = jnp.maximum(h * p["gfin"] + p["bfin"], 0.0)
    return mm(h, p["wlin"]) + p["blin"]


if __name__ == "__main__":
    key = jax.random.PRNGKey(0)
    k_x, k_p = jax.random.split(key)

    # Deliberately not a multiple of SUB: the ragged tail is padded/sliced in
    # the wrapper. 2000 points -> TILE_N = 1024, grid of 2 steps (both v7x TCs
    # active), 2 x 512-lane sub-chunks per step.
    n_points = 2000
    x = jax.random.normal(k_x, (n_points, C_IN), jnp.float32)
    params = init_params(k_p)

    out = jax.block_until_ready(naive_unet_forward(x, params))
    ref = reference_forward(x, params)

    assert out.shape == (n_points, C_OUT)
    assert out.dtype == jnp.bfloat16
    out_f32 = out.astype(jnp.float32)
    max_err = float(jnp.max(jnp.abs(out_f32 - ref)))
    assert jnp.allclose(out_f32, ref, atol=2e-2, rtol=2e-2), (
        f"mismatch vs JAX reference (max abs err {max_err})")

    print("KERNEL_OK")
</pallas_src>

<mosaic_0001>
module attributes {stable_mosaic.version = 11 : i64} {
  func.func @unet_pointwise_kernel(%arg0: i32, %arg1: memref<3x1024xbf16, #tpu.memory_space<vmem>>, %arg2: memref<32x3xbf16, #tpu.memory_space<vmem>>, %arg3: memref<4x32x32xbf16, #tpu.memory_space<vmem>>, %arg4: memref<8x32x1xf32, #tpu.memory_space<vmem>>, %arg5: memref<20x32xbf16, #tpu.memory_space<vmem>>, %arg6: memref<20x1xf32, #tpu.memory_space<vmem>>, %arg7: memref<20x1024xbf16, #tpu.memory_space<vmem>>) attributes {dimension_semantics = [#tpu.dimension_semantics<parallel>], iteration_bounds = array<i64: 2>, scalar_prefetch = 0 : i64, scratch_operands = 0 : i64, tpu.core_type = #tpu.core_type<tc>, window_params = [{transform_indices = @transform_0, window_bounds = array<i64: 3, 1024>}, {pipeline_mode = #tpu.pipeline_mode<synchronous>, transform_indices = @transform_1, window_bounds = array<i64: 32, 3>}, {pipeline_mode = #tpu.pipeline_mode<synchronous>, transform_indices = @transform_2, window_bounds = array<i64: 4, 32, 32>}, {pipeline_mode = #tpu.pipeline_mode<synchronous>, transform_indices = @transform_3, window_bounds = array<i64: 8, 32, 1>}, {pipeline_mode = #tpu.pipeline_mode<synchronous>, transform_indices = @transform_4, window_bounds = array<i64: 20, 32>}, {pipeline_mode = #tpu.pipeline_mode<synchronous>, transform_indices = @transform_5, window_bounds = array<i64: 20, 1>}, {transform_indices = @transform_6, window_bounds = array<i64: 20, 1024>}]} {
    %c0 = arith.constant 0 : index
    %c0_0 = arith.constant 0 : index
    %0 = vector.load %arg2[%c0, %c0_0] : memref<32x3xbf16, #tpu.memory_space<vmem>>, vector<32x3xbf16>
    %c0_1 = arith.constant 0 : index
    %c0_2 = arith.constant 0 : index
    %c0_3 = arith.constant 0 : index
    %1 = vector.load %arg3[%c0_1, %c0_2, %c0_3] : memref<4x32x32xbf16, #tpu.memory_space<vmem>>, vector<1x32x32xbf16>
    %2 = vector.shape_cast %1 : vector<1x32x32xbf16> to vector<32x32xbf16>
    %c1 = arith.constant 1 : index
    %c0_4 = arith.constant 0 : index
    %c0_5 = arith.constant 0 : index
    %3 = vector.load %arg3[%c1, %c0_4, %c0_5] : memref<4x32x32xbf16, #tpu.memory_space<vmem>>, vector<1x32x32xbf16>
    %4 = vector.shape_cast %3 : vector<1x32x32xbf16> to vector<32x32xbf16>
    %c2 = arith.constant 2 : index
    %c0_6 = arith.constant 0 : index
    %c0_7 = arith.constant 0 : index
    %5 = vector.load %arg3[%c2, %c0_6, %c0_7] : memref<4x32x32xbf16, #tpu.memory_space<vmem>>, vector<1x32x32xbf16>
    %6 = vector.shape_cast %5 : vector<1x32x32xbf16> to vector<32x32xbf16>
    %c3 = arith.constant 3 : index
    %c0_8 = arith.constant 0 : index
    %c0_9 = arith.constant 0 : index
    %7 = vector.load %arg3[%c3, %c0_8, %c0_9] : memref<4x32x32xbf16, #tpu.memory_space<vmem>>, vector<1x32x32xbf16>
    %8 = vector.shape_cast %7 : vector<1x32x32xbf16> to vector<32x32xbf16>
    %c0_10 = arith.constant 0 : index
    %c0_11 = arith.constant 0 : index
    %c0_12 = arith.constant 0 : index
    %9 = vector.load %arg4[%c0_10, %c0_11, %c0_12] : memref<8x32x1xf32, #tpu.memory_space<vmem>>, vector<1x32x1xf32>
    %10 = vector.shape_cast %9 : vector<1x32x1xf32> to vector<32x1xf32>
    %c1_13 = arith.constant 1 : index
    %c0_14 = arith.constant 0 : index
    %c0_15 = arith.constant 0 : index
    %11 = vector.load %arg4[%c1_13, %c0_14, %c0_15] : memref<8x32x1xf32, #tpu.memory_space<vmem>>, vector<1x32x1xf32>
    %12 = vector.shape_cast %11 : vector<1x32x1xf32> to vector<32x1xf32>
    %c2_16 = arith.constant 2 : index
    %c0_17 = arith.constant 0 : index
    %c0_18 = arith.constant 0 : index
    %13 = vector.load %arg4[%c2_16, %c0_17, %c0_18] : memref<8x32x1xf32, #tpu.memory_space<vmem>>, vector<1x32x1xf32>
    %14 = vector.shape_cast %13 : vector<1x32x1xf32> to vector<32x1xf32>
    %c3_19 = arith.constant 3 : index
    %c0_20 = arith.constant 0 : index
    %c0_21 = arith.constant 0 : index
    %15 = vector.load %arg4[%c3_19, %c0_20, %c0_21] : memref<8x32x1xf32, #tpu.memory_space<vmem>>, vector<1x32x1xf32>
    %16 = vector.shape_cast %15 : vector<1x32x1xf32> to vector<32x1xf32>
    %c4 = arith.constant 4 : index
    %c0_22 = arith.constant 0 : index
    %c0_23 = arith.constant 0 : index
    %17 = vector.load %arg4[%c4, %c0_22, %c0_23] : memref<8x32x1xf32, #tpu.memory_space<vmem>>, vector<1x32x1xf32>
    %18 = vector.shape_cast %17 : vector<1x32x1xf32> to vector<32x1xf32>
    %c5 = arith.constant 5 : index
    %c0_24 = arith.constant 0 : index
    %c0_25 = arith.constant 0 : index
    %19 = vector.load %arg4[%c5, %c0_24, %c0_25] : memref<8x32x1xf32, #tpu.memory_space<vmem>>, vector<1x32x1xf32>
    %20 = vector.shape_cast %19 : vector<1x32x1xf32> to vector<32x1xf32>
    %c6 = arith.constant 6 : index
    %c0_26 = arith.constant 0 : index
    %c0_27 = arith.constant 0 : index
    %21 = vector.load %arg4[%c6, %c0_26, %c0_27] : memref<8x32x1xf32, #tpu.memory_space<vmem>>, vector<1x32x1xf32>
    %22 = vector.shape_cast %21 : vector<1x32x1xf32> to vector<32x1xf32>
    %c7 = arith.constant 7 : index
    %c0_28 = arith.constant 0 : index
    %c0_29 = arith.constant 0 : index
    %23 = vector.load %arg4[%c7, %c0_28, %c0_29] : memref<8x32x1xf32, #tpu.memory_space<vmem>>, vector<1x32x1xf32>
    %24 = vector.shape_cast %23 : vector<1x32x1xf32> to vector<32x1xf32>
    %c0_30 = arith.constant 0 : index
    %c0_31 = arith.constant 0 : index
    %25 = vector.load %arg5[%c0_30, %c0_31] : memref<20x32xbf16, #tpu.memory_space<vmem>>, vector<20x32xbf16>
    %c0_32 = arith.constant 0 : index
    %c0_33 = arith.constant 0 : index
    %26 = vector.load %arg6[%c0_32, %c0_33] : memref<20x1xf32, #tpu.memory_space<vmem>>, vector<20x1xf32>
    %c0_i32 = arith.constant 0 : i32
    %c512_i32 = arith.constant 512 : i32
    %27 = arith.muli %c0_i32, %c512_i32 : i32
    %28 = tpu.assume_multiple %27, 512 : i32
    %c0_34 = arith.constant 0 : index
    %29 = arith.index_cast %28 : i32 to index
    %30 = vector.load %arg1[%c0_34, %29] : memref<3x1024xbf16, #tpu.memory_space<vmem>>, vector<3x512xbf16>
    %cst = arith.constant dense<0.000000e+00> : vector<32x512xf32>
    %31 = tpu.matmul %0, %30, %cst {dimension_numbers = #tpu.dot_dimension_numbers<[1], [0], [0], [1], [0, 0, 1, 1], [], []>} : vector<32x3xbf16>, vector<3x512xbf16>, vector<32x512xf32> -> vector<32x512xf32>
    %32 = vector.broadcast %10 : vector<32x1xf32> to vector<32x512xf32>
    %33 = arith.mulf %31, %32 : vector<32x512xf32>
    %34 = vector.broadcast %16 : vector<32x1xf32> to vector<32x512xf32>
    %35 = arith.addf %33, %34 : vector<32x512xf32>
    %cst_35 = arith.constant 0.000000e+00 : f32
    %36 = vector.broadcast %cst_35 : f32 to vector<32x512xf32>
    %37 = arith.maximumf %35, %36 : vector<32x512xf32>
    %38 = arith.truncf %37 : vector<32x512xf32> to vector<32x512xbf16>
    %cst_36 = arith.constant dense<0.000000e+00> : vector<32x512xf32>
    %39 = tpu.matmul %2, %38, %cst_36 {dimension_numbers = #tpu.dot_dimension_numbers<[1], [0], [0], [1], [0, 0, 1, 1], [], []>} : vector<32x32xbf16>, vector<32x512xbf16>, vector<32x512xf32> -> vector<32x512xf32>
    %40 = vector.broadcast %20 : vector<32x1xf32> to vector<32x512xf32>
    %41 = arith.addf %39, %40 : vector<32x512xf32>
    %cst_37 = arith.constant 0.000000e+00 : f32
    %42 = vector.broadcast %cst_37 : f32 to vector<32x512xf32>
    %43 = arith.maximumf %41, %42 : vector<32x512xf32>
    %44 = arith.truncf %43 : vector<32x512xf32> to vector<32x512xbf16>
    %cst_38 = arith.constant dense<0.000000e+00> : vector<32x512xf32>
    %45 = tpu.matmul %4, %44, %cst_38 {dimension_numbers = #tpu.dot_dimension_numbers<[1], [0], [0], [1], [0, 0, 1, 1], [], []>} : vector<32x32xbf16>, vector<32x512xbf16>, vector<32x512xf32> -> vector<32x512xf32>
    %46 = arith.addf %31, %45 : vector<32x512xf32>
    %47 = vector.broadcast %12 : vector<32x1xf32> to vector<32x512xf32>
    %48 = arith.mulf %46, %47 : vector<32x512xf32>
    %49 = vector.broadcast %18 : vector<32x1xf32> to vector<32x512xf32>
    %50 = arith.addf %48, %49 : vector<32x512xf32>
    %cst_39 = arith.constant 0.000000e+00 : f32
    %51 = vector.broadcast %cst_39 : f32 to vector<32x512xf32>
    %52 = arith.maximumf %50, %51 : vector<32x512xf32>
    %53 = arith.truncf %52 : vector<32x512xf32> to vector<32x512xbf16>
    %cst_40 = arith.constant dense<0.000000e+00> : vector<32x512xf32>
    %54 = tpu.matmul %6, %53, %cst_40 {dimension_numbers = #tpu.dot_dimension_numbers<[1], [0], [0], [1], [0, 0, 1, 1], [], []>} : vector<32x32xbf16>, vector<32x512xbf16>, vector<32x512xf32> -> vector<32x512xf32>
    %55 = vector.broadcast %22 : vector<32x1xf32> to vector<32x512xf32>
    %56 = arith.addf %54, %55 : vector<32x512xf32>
    %cst_41 = arith.constant 0.000000e+00 : f32
    %57 = vector.broadcast %cst_41 : f32 to vector<32x512xf32>
    %58 = arith.maximumf %56, %57 : vector<32x512xf32>
    %59 = arith.truncf %58 : vector<32x512xf32> to vector<32x512xbf16>
    %cst_42 = arith.constant dense<0.000000e+00> : vector<32x512xf32>
    %60 = tpu.matmul %8, %59, %cst_42 {dimension_numbers = #tpu.dot_dimension_numbers<[1], [0], [0], [1], [0, 0, 1, 1], [], []>} : vector<32x32xbf16>, vector<32x512xbf16>, vector<32x512xf32> -> vector<32x512xf32>
    %61 = arith.addf %46, %60 : vector<32x512xf32>
    %62 = vector.broadcast %14 : vector<32x1xf32> to vector<32x512xf32>
    %63 = arith.mulf %61, %62 : vector<32x512xf32>
    %64 = vector.broadcast %24 : vector<32x1xf32> to vector<32x512xf32>
    %65 = arith.addf %63, %64 : vector<32x512xf32>
    %cst_43 = arith.constant 0.000000e+00 : f32
    %66 = vector.broadcast %cst_43 : f32 to vector<32x512xf32>
    %67 = arith.maximumf %65, %66 : vector<32x512xf32>
    %68 = arith.truncf %67 : vector<32x512xf32> to vector<32x512xbf16>
    %cst_44 = arith.constant dense<0.000000e+00> : vector<20x512xf32>
    %69 = tpu.matmul %25, %68, %cst_44 {dimension_numbers = #tpu.dot_dimension_numbers<[1], [0], [0], [1], [0, 0, 1, 1], [], []>} : vector<20x32xbf16>, vector<32x512xbf16>, vector<20x512xf32> -> vector<20x512xf32>
    %70 = vector.broadcast %26 : vector<20x1xf32> to vector<20x512xf32>
    %71 = arith.addf %69, %70 : vector<20x512xf32>
    %72 = arith.truncf %71 : vector<20x512xf32> to vector<20x512xbf16>
    %c0_45 = arith.constant 0 : index
    %73 = arith.index_cast %28 : i32 to index
    %74 = vector.load %arg7[%c0_45, %73] : memref<20x1024xbf16, #tpu.memory_space<vmem>>, vector<20x512xbf16>
    tpu.vector_store %arg7[%c0_45, %73], %72 {strides = array<i32>} : memref<20x1024xbf16, #tpu.memory_space<vmem>>, vector<20x512xbf16>,
    %c1_i32 = arith.constant 1 : i32
    %c512_i32_46 = arith.constant 512 : i32
    %75 = arith.muli %c1_i32, %c512_i32_46 : i32
    %76 = tpu.assume_multiple %75, 512 : i32
    %c0_47 = arith.constant 0 : index
    %77 = arith.index_cast %76 : i32 to index
    %78 = vector.load %arg1[%c0_47, %77] : memref<3x1024xbf16, #tpu.memory_space<vmem>>, vector<3x512xbf16>
    %cst_48 = arith.constant dense<0.000000e+00> : vector<32x512xf32>
    %79 = tpu.matmul %0, %78, %cst_48 {dimension_numbers = #tpu.dot_dimension_numbers<[1], [0], [0], [1], [0, 0, 1, 1], [], []>} : vector<32x3xbf16>, vector<3x512xbf16>, vector<32x512xf32> -> vector<32x512xf32>
    %80 = vector.broadcast %10 : vector<32x1xf32> to vector<32x512xf32>
    %81 = arith.mulf %79, %80 : vector<32x512xf32>
    %82 = vector.broadcast %16 : vector<32x1xf32> to vector<32x512xf32>
    %83 = arith.addf %81, %82 : vector<32x512xf32>
    %cst_49 = arith.constant 0.000000e+00 : f32
    %84 = vector.broadcast %cst_49 : f32 to vector<32x512xf32>
    %85 = arith.maximumf %83, %84 : vector<32x512xf32>
    %86 = arith.truncf %85 : vector<32x512xf32> to vector<32x512xbf16>
    %cst_50 = arith.constant dense<0.000000e+00> : vector<32x512xf32>
    %87 = tpu.matmul %2, %86, %cst_50 {dimension_numbers = #tpu.dot_dimension_numbers<[1], [0], [0], [1], [0, 0, 1, 1], [], []>} : vector<32x32xbf16>, vector<32x512xbf16>, vector<32x512xf32> -> vector<32x512xf32>
    %88 = vector.broadcast %20 : vector<32x1xf32> to vector<32x512xf32>
    %89 = arith.addf %87, %88 : vector<32x512xf32>
    %cst_51 = arith.constant 0.000000e+00 : f32
    %90 = vector.broadcast %cst_51 : f32 to vector<32x512xf32>
    %91 = arith.maximumf %89, %90 : vector<32x512xf32>
    %92 = arith.truncf %91 : vector<32x512xf32> to vector<32x512xbf16>
    %cst_52 = arith.constant dense<0.000000e+00> : vector<32x512xf32>
    %93 = tpu.matmul %4, %92, %cst_52 {dimension_numbers = #tpu.dot_dimension_numbers<[1], [0], [0], [1], [0, 0, 1, 1], [], []>} : vector<32x32xbf16>, vector<32x512xbf16>, vector<32x512xf32> -> vector<32x512xf32>
    %94 = arith.addf %79, %93 : vector<32x512xf32>
    %95 = vector.broadcast %12 : vector<32x1xf32> to vector<32x512xf32>
    %96 = arith.mulf %94, %95 : vector<32x512xf32>
    %97 = vector.broadcast %18 : vector<32x1xf32> to vector<32x512xf32>
    %98 = arith.addf %96, %97 : vector<32x512xf32>
    %cst_53 = arith.constant 0.000000e+00 : f32
    %99 = vector.broadcast %cst_53 : f32 to vector<32x512xf32>
    %100 = arith.maximumf %98, %99 : vector<32x512xf32>
    %101 = arith.truncf %100 : vector<32x512xf32> to vector<32x512xbf16>
    %cst_54 = arith.constant dense<0.000000e+00> : vector<32x512xf32>
    %102 = tpu.matmul %6, %101, %cst_54 {dimension_numbers = #tpu.dot_dimension_numbers<[1], [0], [0], [1], [0, 0, 1, 1], [], []>} : vector<32x32xbf16>, vector<32x512xbf16>, vector<32x512xf32> -> vector<32x512xf32>
    %103 = vector.broadcast %22 : vector<32x1xf32> to vector<32x512xf32>
    %104 = arith.addf %102, %103 : vector<32x512xf32>
    %cst_55 = arith.constant 0.000000e+00 : f32
    %105 = vector.broadcast %cst_55 : f32 to vector<32x512xf32>
    %106 = arith.maximumf %104, %105 : vector<32x512xf32>
    %107 = arith.truncf %106 : vector<32x512xf32> to vector<32x512xbf16>
    %cst_56 = arith.constant dense<0.000000e+00> : vector<32x512xf32>
    %108 = tpu.matmul %8, %107, %cst_56 {dimension_numbers = #tpu.dot_dimension_numbers<[1], [0], [0], [1], [0, 0, 1, 1], [], []>} : vector<32x32xbf16>, vector<32x512xbf16>, vector<32x512xf32> -> vector<32x512xf32>
    %109 = arith.addf %94, %108 : vector<32x512xf32>
    %110 = vector.broadcast %14 : vector<32x1xf32> to vector<32x512xf32>
    %111 = arith.mulf %109, %110 : vector<32x512xf32>
    %112 = vector.broadcast %24 : vector<32x1xf32> to vector<32x512xf32>
    %113 = arith.addf %111, %112 : vector<32x512xf32>
    %cst_57 = arith.constant 0.000000e+00 : f32
    %114 = vector.broadcast %cst_57 : f32 to vector<32x512xf32>
    %115 = arith.maximumf %113, %114 : vector<32x512xf32>
    %116 = arith.truncf %115 : vector<32x512xf32> to vector<32x512xbf16>
    %cst_58 = arith.constant dense<0.000000e+00> : vector<20x512xf32>
    %117 = tpu.matmul %25, %116, %cst_58 {dimension_numbers = #tpu.dot_dimension_numbers<[1], [0], [0], [1], [0, 0, 1, 1], [], []>} : vector<20x32xbf16>, vector<32x512xbf16>, vector<20x512xf32> -> vector<20x512xf32>
    %118 = vector.broadcast %26 : vector<20x1xf32> to vector<20x512xf32>
    %119 = arith.addf %117, %118 : vector<20x512xf32>
    %120 = arith.truncf %119 : vector<20x512xf32> to vector<20x512xbf16>
    %c0_59 = arith.constant 0 : index
    %121 = arith.index_cast %76 : i32 to index
    %122 = vector.load %arg7[%c0_59, %121] : memref<20x1024xbf16, #tpu.memory_space<vmem>>, vector<20x512xbf16>
    tpu.vector_store %arg7[%c0_59, %121], %120 {strides = array<i32>} : memref<20x1024xbf16, #tpu.memory_space<vmem>>, vector<20x512xbf16>,
    %c2_i32 = arith.constant 2 : i32
    return
  }
  func.func @transform_0(%arg0: i32) -> (i32, i32) {
    %c0_i32 = arith.constant 0 : i32
    %c0_i32_0 = arith.constant 0 : i32
    return %c0_i32, %arg0 : i32, i32
  }
  func.func @transform_1(%arg0: i32) -> (i32, i32) {
    %c0_i32 = arith.constant 0 : i32
    %c0_i32_0 = arith.constant 0 : i32
    %c0_i32_1 = arith.constant 0 : i32
    return %c0_i32, %c0_i32_0 : i32, i32
  }
  func.func @transform_2(%arg0: i32) -> (i32, i32, i32) {
    %c0_i32 = arith.constant 0 : i32
    %c0_i32_0 = arith.constant 0 : i32
    %c0_i32_1 = arith.constant 0 : i32
    %c0_i32_2 = arith.constant 0 : i32
    return %c0_i32, %c0_i32_0, %c0_i32_1 : i32, i32, i32
  }
  func.func @transform_3(%arg0: i32) -> (i32, i32, i32) {
    %c0_i32 = arith.constant 0 : i32
    %c0_i32_0 = arith.constant 0 : i32
    %c0_i32_1 = arith.constant 0 : i32
    %c0_i32_2 = arith.constant 0 : i32
    return %c0_i32, %c0_i32_0, %c0_i32_1 : i32, i32, i32
  }
  func.func @transform_4(%arg0: i32) -> (i32, i32) {
    %c0_i32 = arith.constant 0 : i32
    %c0_i32_0 = arith.constant 0 : i32
    %c0_i32_1 = arith.constant 0 : i32
    return %c0_i32, %c0_i32_0 : i32, i32
  }
  func.func @transform_5(%arg0: i32) -> (i32, i32) {
    %c0_i32 = arith.constant 0 : i32
    %c0_i32_0 = arith.constant 0 : i32
    %c0_i32_1 = arith.constant 0 : i32
    return %c0_i32, %c0_i32_0 : i32, i32
  }
  func.func @transform_6(%arg0: i32) -> (i32, i32) {
    %c0_i32 = arith.constant 0 : i32
    %c0_i32_0 = arith.constant 0 : i32
    return %c0_i32, %arg0 : i32, i32
  }
}

</mosaic_0001>

<llo_original>
// kernel: tpu_custom_call.1
$region0: #{tpu_custom_call.1}
  #allocation0 [shape = 'u32[]', space=smem, size = 0x4, offset = 0x4, fixed_abs, tag = 'smem constant byte address 0x4 - core index']
  #allocation1 [shape = 'u32[144,128]{1,0:T(1,128)}', space=vmem, size = 0x12000, scoped, tag = 'internal scratch']
  %s0 = inlined_call_operand.vmem [shape: bf16[3,2048], index: 0, kind: input, shape index: {}]
  %s1 = inlined_call_operand.vmem [shape: bf16[32,3], index: 1, kind: input, shape index: {}]
  %s2 = inlined_call_operand.vmem [shape: bf16[4,32,32], index: 2, kind: input, shape index: {}]
  %s3 = inlined_call_operand.vmem [shape: f32[8,32,1], index: 3, kind: input, shape index: {}]
  %s4 = inlined_call_operand.vmem [shape: bf16[20,32], index: 4, kind: input, shape index: {}]
  %s5 = inlined_call_operand.vmem [shape: f32[20,1], index: 5, kind: input, shape index: {}]
  %s6 = inlined_call_operand.hbm [shape: bf16[20,2048], index: 6, kind: output, shape index: {}]
  %s7 = sld [smem:[#allocation0]]
  $region57: #{tpu_custom_call.1} parent=0
    _
  %s9 = ssub.s32 1, %s7
  %s10 = scalar_select 0, %s9, %s7
  $region1: #{tpu_custom_call.1} parent=0
    #allocation2 [shape = 'u8[98304]{0}', space=vmem, size = 0x18000, scoped, tag = 'output window, operand 0']
    #allocation3 [shape = 's32[2]{0}', space=sflag, size = 0x8, scoped, tag = 'scoped memory for tpu_custom_call.1']
    %11 = vsyncpa [#allocation3], 0
    %s12 = scalar_lea.sflag [#allocation3], 1
    %13 = vsyncpa %s12, 0
    loop: start=0, step=1, limit=4
    $region2: #{tpu_custom_call.1} parent=1 // loop_pre_header
      _
    $region3: #{tpu_custom_call.1} parent=1 // loop_header
      %s15 = sphi 0, %s19
      %p16 = scmp.ge.s32.totalorder %s15, 4
      %s25 = sphi 0, %s27
      %s28 = sphi 0, %s25
      %s29 = sphi 0, %s28
      %s45 = sphi 0, %s29
      %s49 = sphi 0, %s49
      %s51 = sphi 0, %s49
      %s52 = sphi 0, %s51
      %s66 = sphi 0, %s52
      %s70 = sphi 0, %s70
      %s72 = sphi 0, %s70
      %s73 = sphi 0, %s72
      %s87 = sphi 0, %s73
      %s91 = sphi 0, %s91
      %s93 = sphi 0, %s91
      %s94 = sphi 0, %s93
      %s108 = sphi 0, %s94
      %s112 = sphi 0, %s112
      %s114 = sphi 0, %s112
      %s115 = sphi 0, %s114
      %s129 = sphi 0, %s115
      %s133 = sphi 0, %s133
      %s135 = sphi 0, %s133
      %s136 = sphi 0, %s135
      %s150 = sphi 0, %s136
      %s156 = sphi 0, %s158
      %s159 = sphi 0, %s156
      %s160 = sphi 0, %s159
      %s176 = sphi 0, %s160
    $region4: #{tpu_custom_call.1} parent=1 // loop_header_branch
      %18 = sbr.rel (%p16) target = $region8
    $region5: #{tpu_custom_call.1} parent=1 // loop_body
      %s20 = ssub.s32 %s15, 1
      %s21 = ssub.s32 %s15, 2
      %s22 = sadd.s32 %s15, 1
      %s23 = ssub.s32 %s15, %s22
      %p24 = scmp.eq.s32.totalorder %s23, 0
      %s26 = sadd.s32 %s25, 1
      %s27 = scalar_select %p24, %s25, %s26
      %p30 = pneg %p24
      %p31 = scmp.eq.s32.totalorder %s15, 1
      %p32 = por %p30, %p31
      %p33 = scmp.ne.s32.totalorder %s25, %s28
      %p34 = scmp.eq.s32.totalorder %s15, 0
      %p35 = por %p33, %p34
      %p36 = scmp.ne.s32.totalorder %s25, %s28
      %p37 = scmp.eq.s32.totalorder %s20, 1
      %p38 = por %p36, %p37
      %p39 = scmp.ne.s32.totalorder %s28, %s29
      %p40 = scmp.eq.s32.totalorder %s20, 0
      %p41 = por %p39, %p40
      %p42 = scmp.ne.s32.totalorder %s28, %s29
      %p43 = scmp.eq.s32.totalorder %s21, 1
      %p44 = por %p42, %p43
      %p46 = scmp.ne.s32.totalorder %s29, %s45
      %p47 = scmp.eq.s32.totalorder %s21, 0
      %p48 = por %p46, %p47
      %s50 = sadd.s32 %s49, 1
      %p53 = scmp.eq.s32.totalorder %s15, 1
      %p54 = scmp.ne.s32.totalorder %s49, %s51
      %p55 = scmp.eq.s32.totalorder %s15, 0
      %p56 = por %p54, %p55
      %p57 = scmp.ne.s32.totalorder %s49, %s51
      %p58 = scmp.eq.s32.totalorder %s20, 1
      %p59 = por %p57, %p58
      %p60 = scmp.ne.s32.totalorder %s51, %s52
      %p61 = scmp.eq.s32.totalorder %s20, 0
      %p62 = por %p60, %p61
      %p63 = scmp.ne.s32.totalorder %s51, %s52
      %p64 = scmp.eq.s32.totalorder %s21, 1
      %p65 = por %p63, %p64
      %p67 = scmp.ne.s32.totalorder %s52, %s66
      %p68 = scmp.eq.s32.totalorder %s21, 0
      %p69 = por %p67, %p68
      %s71 = sadd.s32 %s70, 1
      %p74 = scmp.eq.s32.totalorder %s15, 1
      %p75 = scmp.ne.s32.totalorder %s70, %s72
      %p76 = scmp.eq.s32.totalorder %s15, 0
      %p77 = por %p75, %p76
      %p78 = scmp.ne.s32.totalorder %s70, %s72
      %p79 = scmp.eq.s32.totalorder %s20, 1
      %p80 = por %p78, %p79
      %p81 = scmp.ne.s32.totalorder %s72, %s73
      %p82 = scmp.eq.s32.totalorder %s20, 0
      %p83 = por %p81, %p82
      %p84 = scmp.ne.s32.totalorder %s72, %s73
      %p85 = scmp.eq.s32.totalorder %s21, 1
      %p86 = por %p84, %p85
      %p88 = scmp.ne.s32.totalorder %s73, %s87
      %p89 = scmp.eq.s32.totalorder %s21, 0
      %p90 = por %p88, %p89
      %s92 = sadd.s32 %s91, 1
      %p95 = scmp.eq.s32.totalorder %s15, 1
      %p96 = scmp.ne.s32.totalorder %s91, %s93
      %p97 = scmp.eq.s32.totalorder %s15, 0
      %p98 = por %p96, %p97
      %p99 = scmp.ne.s32.totalorder %s91, %s93
      %p100 = scmp.eq.s32.totalorder %s20, 1
      %p101 = por %p99, %p100
      %p102 = scmp.ne.s32.totalorder %s93, %s94
      %p103 = scmp.eq.s32.totalorder %s20, 0
      %p104 = por %p102, %p103
      %p105 = scmp.ne.s32.totalorder %s93, %s94
      %p106 = scmp.eq.s32.totalorder %s21, 1
      %p107 = por %p105, %p106
      %p109 = scmp.ne.s32.totalorder %s94, %s108
      %p110 = scmp.eq.s32.totalorder %s21, 0
      %p111 = por %p109, %p110
      %s113 = sadd.s32 %s112, 1
      %p116 = scmp.eq.s32.totalorder %s15, 1
      %p117 = scmp.ne.s32.totalorder %s112, %s114
      %p118 = scmp.eq.s32.totalorder %s15, 0
      %p119 = por %p117, %p118
      %p120 = scmp.ne.s32.totalorder %s112, %s114
      %p121 = scmp.eq.s32.totalorder %s20, 1
      %p122 = por %p120, %p121
      %p123 = scmp.ne.s32.totalorder %s114, %s115
      %p124 = scmp.eq.s32.totalorder %s20, 0
      %p125 = por %p123, %p124
      %p126 = scmp.ne.s32.totalorder %s114, %s115
      %p127 = scmp.eq.s32.totalorder %s21, 1
      %p128 = por %p126, %p127
      %p130 = scmp.ne.s32.totalorder %s115, %s129
      %p131 = scmp.eq.s32.totalorder %s21, 0
      %p132 = por %p130, %p131
      %s134 = sadd.s32 %s133, 1
      %p137 = scmp.eq.s32.totalorder %s15, 1
      %p138 = scmp.ne.s32.totalorder %s133, %s135
      %p139 = scmp.eq.s32.totalorder %s15, 0
      %p140 = por %p138, %p139
      %p141 = scmp.ne.s32.totalorder %s133, %s135
      %p142 = scmp.eq.s32.totalorder %s20, 1
      %p143 = por %p141, %p142
      %p144 = scmp.ne.s32.totalorder %s135, %s136
      %p145 = scmp.eq.s32.totalorder %s20, 0
      %p146 = por %p144, %p145
      %p147 = scmp.ne.s32.totalorder %s135, %s136
      %p148 = scmp.eq.s32.totalorder %s21, 1
      %p149 = por %p147, %p148
      %p151 = scmp.ne.s32.totalorder %s136, %s150
      %p152 = scmp.eq.s32.totalorder %s21, 0
      %p153 = por %p151, %p152
      %s154 = ssub.s32 %s15, %s22
      %p155 = scmp.eq.s32.totalorder %s154, 0
      %s157 = sadd.s32 %s156, 1
      %s158 = scalar_select %p155, %s156, %s157
      %p161 = pneg %p155
      %p162 = scmp.eq.s32.totalorder %s15, 1
      %p163 = por %p161, %p162
      %p164 = scmp.ne.s32.totalorder %s156, %s159
      %p165 = scmp.eq.s32.totalorder %s15, 0
      %p166 = por %p164, %p165
      %p167 = scmp.ne.s32.totalorder %s156, %s159
      %p168 = scmp.eq.s32.totalorder %s20, 1
      %p169 = por %p167, %p168
      %p170 = scmp.ne.s32.totalorder %s159, %s160
      %p171 = scmp.eq.s32.totalorder %s20, 0
      %p172 = por %p170, %p171
      %p173 = scmp.ne.s32.totalorder %s159, %s160
      %p174 = scmp.eq.s32.totalorder %s21, 1
      %p175 = por %p173, %p174
      %p177 = scmp.ne.s32.totalorder %s160, %s176
      %p178 = scmp.eq.s32.totalorder %s21, 0
      %p179 = por %p177, %p178
      %p180 = scmp.le.s32.totalorder 1, %s15
      %p181 = scmp.lt.s32.totalorder %s15, 3
      %p182 = pnand %p180, %p181
      %p183 = pneg %p182
      // Predicated region
      $region9: #{tpu_custom_call.1} parent=5 // pred_check
        _
      $region10: #{tpu_custom_call.1} parent=5 // pred_check_branch
        %185 = sbr.rel (%p182) target = $region12
      $region11: #{tpu_custom_call.1} parent=5 // pred_region
        %s186 = ssub.s32 %s15, 1
        // Predicated region
        $region13: #{tpu_custom_call.1} parent=11 // pred_check
          %p187 = pneg %p62
        $region14: #{tpu_custom_call.1} parent=11 // pred_check_branch
          %189 = sbr.rel (%p187) target = $region16
        $region15: #{tpu_custom_call.1} parent=11 // pred_region
          _
        $region16: #{tpu_custom_call.1} parent=11 // pred_fallthru
          _
        // Predicated region
        $region17: #{tpu_custom_call.1} parent=11 // pred_check
          %p190 = pneg %p83
        $region18: #{tpu_custom_call.1} parent=11 // pred_check_branch
          %192 = sbr.rel (%p190) target = $region20
        $region19: #{tpu_custom_call.1} parent=11 // pred_region
          _
        $region20: #{tpu_custom_call.1} parent=11 // pred_fallthru
          _
        // Predicated region
        $region21: #{tpu_custom_call.1} parent=11 // pred_check
          %p193 = pneg %p104
        $region22: #{tpu_custom_call.1} parent=11 // pred_check_branch
          %195 = sbr.rel (%p193) target = $region24
        $region23: #{tpu_custom_call.1} parent=11 // pred_region
          _
        $region24: #{tpu_custom_call.1} parent=11 // pred_fallthru
          _
        // Predicated region
        $region25: #{tpu_custom_call.1} parent=11 // pred_check
          %p196 = pneg %p125
        $region26: #{tpu_custom_call.1} parent=11 // pred_check_branch
          %198 = sbr.rel (%p196) target = $region28
        $region27: #{tpu_custom_call.1} parent=11 // pred_region
          _
        $region28: #{tpu_custom_call.1} parent=11 // pred_fallthru
          _
        // Predicated region
        $region29: #{tpu_custom_call.1} parent=11 // pred_check
          %p199 = pneg %p146
        $region30: #{tpu_custom_call.1} parent=11 // pred_check_branch
          %201 = sbr.rel (%p199) target = $region32
        $region31: #{tpu_custom_call.1} parent=11 // pred_region
          _
        $region32: #{tpu_custom_call.1} parent=11 // pred_fallthru
          _
      $region12: #{tpu_custom_call.1} parent=5 // pred_fallthru
        _
      %p202 = scmp.lt.s32.totalorder %s15, 2
      // Predicated region
      $region33: #{tpu_custom_call.1} parent=5 // pred_check
        %p203 = pneg %p202
      $region34: #{tpu_custom_call.1} parent=5 // pred_check_branch
        %205 = sbr.rel (%p203) target = $region36
      $region35: #{tpu_custom_call.1} parent=5 // pred_region
        // Predicated region
        $region37: #{tpu_custom_call.1} parent=35 // pred_check
          %p206 = pneg %p35
        $region38: #{tpu_custom_call.1} parent=35 // pred_check_branch
          %208 = sbr.rel (%p206) target = $region40
        $region39: #{tpu_custom_call.1} parent=35 // pred_region
          %s209 = smul.u32 8, %s15
          %p210 = scmp.lt.s32.totalorder %s209, 15
          %s211 = scalar_select %p210, %s209, 15
          %s212 = smul.addr %s211, 2
          %s213 = scalar_lea.vmem %s0, %s212
          %s214 = smul.u32 8, %s15
        $region40: #{tpu_custom_call.1} parent=35 // pred_fallthru
          _
      $region36: #{tpu_custom_call.1} parent=5 // pred_fallthru
        _
      %p215 = scmp.le.s32.totalorder 1, %s15
      %p216 = scmp.lt.s32.totalorder %s15, 3
      %p217 = pnand %p215, %p216
      %p218 = pneg %p217
      // Predicated region
      $region41: #{tpu_custom_call.1} parent=5 // pred_check
        _
      $region42: #{tpu_custom_call.1} parent=5 // pred_check_branch
        %220 = sbr.rel (%p217) target = $region44
      $region43: #{tpu_custom_call.1} parent=5 // pred_region
        %s221 = ssub.s32 %s15, 1
        %s222 = smul.u32 8, %s20
        %p223 = scmp.lt.s32.totalorder %s222, 15
        %s224 = scalar_select %p223, %s222, 15
        %s225 = smul.addr %s224, 2
        %s226 = scalar_lea.vmem %s0, %s225
        %p227 = pneg %p41
        %p228 = pneg %p38
        %p229 = pneg %p62
        %p230 = pneg %p59
        %p231 = pneg %p83
        %p232 = pneg %p80
        %p233 = pneg %p104
        %p234 = pneg %p101
        %p235 = pneg %p125
        %p236 = pneg %p122
        %p237 = pneg %p146
        %p238 = pneg %p143
        %p239 = pneg %p172
        %p240 = pneg %p169
        %s241 = sand.u32 %s159, 1
        %s242 = scalar_lea.sflag [#allocation3], %s241
        %s243 = sand.u32 %s159, 1
        %s244 = smul.addr %s243, 96
        %s245 = scalar_lea.vmem [#allocation2], %s244
        %s246 = smul.u32 8, %s20
        %p247 = scmp.lt.s32.totalorder %s246, 15
        %s248 = scalar_select %p247, %s246, 15
        %s249 = smul.addr %s248, 2
        %s250 = scalar_lea.vmem %s0, %s249
        %s251 = smul.u32 8, %s20
        %s252 = smul.u32 8, %s20
        %v254 = vld [vmem:[%s1] sm:$0xf]
        %v255 = vld [vmem:[%s1 + $0x4] sm:$0xf]
        %v256 = vld [vmem:[%s1 + $0x8] sm:$0xf]
        %v257 = vld [vmem:[%s1 + $0xc] sm:$0xf]
        %v258 = vld [vmem:[%s2] sm:$0xf]
        %v259 = vld [vmem:[%s2 + $0x4] sm:$0xf]
        %v260 = vld [vmem:[%s2 + $0x8] sm:$0xf]
        %v261 = vld [vmem:[%s2 + $0xc] sm:$0xf]
        %s262 = scalar_lea.vmem %s2, 16
        %v263 = vld [vmem:[%s262] sm:$0xf]
        %v264 = vld [vmem:[%s262 + $0x4] sm:$0xf]
        %v265 = vld [vmem:[%s262 + $0x8] sm:$0xf]
        %v266 = vld [vmem:[%s262 + $0xc] sm:$0xf]
        %s267 = scalar_lea.vmem %s2, 32
        %v268 = vld [vmem:[%s267] sm:$0xf]
        %v269 = vld [vmem:[%s267 + $0x4] sm:$0xf]
        %v270 = vld [vmem:[%s267 + $0x8] sm:$0xf]
        %v271 = vld [vmem:[%s267 + $0xc] sm:$0xf]
        %s272 = scalar_lea.vmem %s2, 48
        %v273 = vld [vmem:[%s272] sm:$0xf]
        %v274 = vld [vmem:[%s272 + $0x4] sm:$0xf]
        %v275 = vld [vmem:[%s272 + $0x8] sm:$0xf]
        %v276 = vld [vmem:[%s272 + $0xc] sm:$0xf]
        %v277 = vld [vmem:[%s3] sm:$0xff]
        %v278 = vld [vmem:[%s3 + $0x8] sm:$0xff]
        %v279 = vld [vmem:[%s3 + $0x10] sm:$0xff]
        %v280 = vld [vmem:[%s3 + $0x18] sm:$0xff]
        %s281 = scalar_lea.vmem %s3, 32
        %v282 = vld [vmem:[%s281] sm:$0xff]
        %v283 = vld [vmem:[%s281 + $0x8] sm:$0xff]
        %v284 = vld [vmem:[%s281 + $0x10] sm:$0xff]
        %v285 = vld [vmem:[%s281 + $0x18] sm:$0xff]
        %s286 = scalar_lea.vmem %s3, 64
        %v287 = vld [vmem:[%s286] sm:$0xff]
        %v288 = vld [vmem:[%s286 + $0x8] sm:$0xff]
        %v289 = vld [vmem:[%s286 + $0x10] sm:$0xff]
        %v290 = vld [vmem:[%s286 + $0x18] sm:$0xff]
        %s291 = scalar_lea.vmem %s3, 96
        %v292 = vld [vmem:[%s291] sm:$0xff]
        %v293 = vld [vmem:[%s291 + $0x8] sm:$0xff]
        %v294 = vld [vmem:[%s291 + $0x10] sm:$0xff]
        %v295 = vld [vmem:[%s291 + $0x18] sm:$0xff]
        %s296 = scalar_lea.vmem %s3, 128
        %v297 = vld [vmem:[%s296] sm:$0xff]
        %v298 = vld [vmem:[%s296 + $0x8] sm:$0xff]
        %v299 = vld [vmem:[%s296 + $0x10] sm:$0xff]
        %v300 = vld [vmem:[%s296 + $0x18] sm:$0xff]
        %s301 = scalar_lea.vmem %s3, 160
        %v302 = vld [vmem:[%s301] sm:$0xff]
        %v303 = vld [vmem:[%s301 + $0x8] sm:$0xff]
        %v304 = vld [vmem:[%s301 + $0x10] sm:$0xff]
        %v305 = vld [vmem:[%s301 + $0x18] sm:$0xff]
        %s306 = scalar_lea.vmem %s3, 192
        %v307 = vld [vmem:[%s306] sm:$0xff]
        %v308 = vld [vmem:[%s306 + $0x8] sm:$0xff]
        %v309 = vld [vmem:[%s306 + $0x10] sm:$0xff]
        %v310 = vld [vmem:[%s306 + $0x18] sm:$0xff]
        %s311 = scalar_lea.vmem %s3, 224
        %v312 = vld [vmem:[%s311] sm:$0xff]
        %v313 = vld [vmem:[%s311 + $0x8] sm:$0xff]
        %v314 = vld [vmem:[%s311 + $0x10] sm:$0xff]
        %v315 = vld [vmem:[%s311 + $0x18] sm:$0xff]
        %v316 = vld [vmem:[%s4] sm:$0xf]
        %v317 = vld [vmem:[%s4 + $0x4] sm:$0xf]
        %v318 = vld [vmem:[%s4 + $0x8] sm:$0x3]
        %v319 = vld [vmem:[%s5] sm:$0xff]
        %v320 = vld [vmem:[%s5 + $0x8] sm:$0xff]
        %v321 = vld [vmem:[%s5 + $0x10] sm:$0xf]
        %v322 = vld [vmem:[%s250] sm:$0xff]
        %v327 = vunpack.c.l.b16 %v254
        %v328 = vunpack.c.l.b16 %v255
        %v329 = vunpack.c.l.b16 %v256
        %v330 = vunpack.c.l.b16 %v257
        %v331 = vpack.c.b16 %v328, %v327
        %v332 = vpack.c.b16 %v330, %v329
        %v334 = vcombine.high %v322, %v322
        %v336 = vunpack.c.l.s4 1983009808
        %v337 = vunpack.c.0.s8 %v336
        %v338 = vlaneseq
        %v339 = vshrl.u32 %v338, 7
        %v340 = vsub.s32 %v337, %v339
        %v341 = vrot.slane %v322, %v340
        %v343 = vunpack.c.l.s4 1983009808
        %v344 = vunpack.c.0.s8 %v343
        %v345 = vlaneseq
        %v346 = vshrl.u32 %v345, 7
        %v347 = vsub.s32 %v344, %v346
        %v348 = vrot.slane %v334, %v347
        %v349 = vcombine.high %v341, %v341
        %v350 = vcombine.high %v348, %v348
        %vm351 = vcmask 23552
        %v353 = vsel %vm351, %v331, 0
        %v356 = vsel %vm351, %v332, 0
        %vm358 = vcmask 1040384
        %vm359 = vcmask 1041408
        %v360 = vsel %vm358, 4294967295, 65535
        %v361 = vsel %vm359, %v360, 0
        %v363 = vand.u32 %v341, %v361
        %v366 = vand.u32 %v349, %v361
        %v369 = vand.u32 %v348, %v361
        %v372 = vand.u32 %v350, %v361
        %374 = vmatprep.subr.bf16.mxu0 0
        %375 = vmatpush1.bf16.msra.mxu0 0
        %376 = vmatprep.subr.bf16.mxu0 0
        %377 = vmatpush1.bf16.msra.mxu0 0
        %378 = vmatprep.subr.bf16.mxu0 0
        %379 = vmatpush1.bf16.msra.mxu0 0
        %380 = vmatprep.subr.bf16.mxu0 0
        %381 = vmatpush1.bf16.msra.mxu0 0
        %382 = vmatprep.subr.bf16.mxu0 0
        %383 = vmatpush1.bf16.msra.mxu0 0
        %384 = vmatprep.subr.bf16.mxu0 0
        %385 = vmatpush1.bf16.msra.mxu0 0
        %386 = vmatprep.subr.bf16.mxu0 0
        %387 = vmatpush1.bf16.msra.mxu0 0
        %388 = vmatprep.subr.bf16.mxu0 %v366
        %389 = vmatpush1.bf16.msra.mxu0 %v363
        %390 = vmatprep.subr.bf16.mxu0 0
        %391 = vmatpush2.bf16.msra.mxu0 0
        %392 = vmatprep.subr.bf16.mxu0 0
        %393 = vmatpush2.bf16.msra.mxu0 0
        %394 = vmatprep.subr.bf16.mxu0 0
        %395 = vmatpush2.bf16.msra.mxu0 0
        %396 = vmatprep.subr.bf16.mxu0 0
        %397 = vmatpush2.bf16.msra.mxu0 0
        %398 = vmatprep.subr.bf16.mxu0 0
        %399 = vmatpush2.bf16.msra.mxu0 0
        %400 = vmatprep.subr.bf16.mxu0 0
        %401 = vmatpush2.bf16.msra.mxu0 0
        %402 = vmatprep.subr.bf16.mxu0 0
        %403 = vmatpush2.bf16.msra.mxu0 0
        %404 = vmatprep.subr.bf16.mxu0 0
        %405 = vmatpush2.bf16.msra.mxu0 0
        %406 = vmatprep.mubr.bf16.mxu0 0
        %407 = vmatmul.mubr.bf16.gmra.mxu0 %v353
        %v408 = vpop.f32.mrf.mxu0
        %v409 = vadd.f32 0.0, %v408
        %v410 = vpop.f32.mrf.mxu0
        %v411 = vadd.f32 0.0, %v410
        %v412 = vpop.f32.mrf.mxu0
        %v413 = vadd.f32 0.0, %v412
        %v414 = vpop.f32.mrf.mxu0
        %v415 = vadd.f32 0.0, %v414
        %416 = vmatprep.mubr.bf16.mxu0 0
        %417 = vmatmul.mubr.bf16.gmra.mxu0 %v356
        %v418 = vpop.f32.mrf.mxu0
        %v419 = vadd.f32 0.0, %v418
        %v420 = vpop.f32.mrf.mxu0
        %v421 = vadd.f32 0.0, %v420
        %v422 = vpop.f32.mrf.mxu0
        %v423 = vadd.f32 0.0, %v422
        %v424 = vpop.f32.mrf.mxu0
        %v425 = vadd.f32 0.0, %v424
        %426 = vdwg.mxu0
        %427 = vmatprep.subr.bf16.mxu0 0
        %428 = vmatpush1.bf16.msra.mxu0 0
        %429 = vmatprep.subr.bf16.mxu0 0
        %430 = vmatpush1.bf16.msra.mxu0 0
        %431 = vmatprep.subr.bf16.mxu0 0
        %432 = vmatpush1.bf16.msra.mxu0 0
        %433 = vmatprep.subr.bf16.mxu0 0
        %434 = vmatpush1.bf16.msra.mxu0 0
        %435 = vmatprep.subr.bf16.mxu0 0
        %436 = vmatpush1.bf16.msra.mxu0 0
        %437 = vmatprep.subr.bf16.mxu0 0
        %438 = vmatpush1.bf16.msra.mxu0 0
        %439 = vmatprep.subr.bf16.mxu0 0
        %440 = vmatpush1.bf16.msra.mxu0 0
        %441 = vmatprep.subr.bf16.mxu0 %v372
        %442 = vmatpush1.bf16.msra.mxu0 %v369
        %443 = vmatprep.subr.bf16.mxu0 0
        %444 = vmatpush2.bf16.msra.mxu0 0
        %445 = vmatprep.subr.bf16.mxu0 0
        %446 = vmatpush2.bf16.msra.mxu0 0
        %447 = vmatprep.subr.bf16.mxu0 0
        %448 = vmatpush2.bf16.msra.mxu0 0
        %449 = vmatprep.subr.bf16.mxu0 0
        %450 = vmatpush2.bf16.msra.mxu0 0
        %451 = vmatprep.subr.bf16.mxu0 0
        %452 = vmatpush2.bf16.msra.mxu0 0
        %453 = vmatprep.subr.bf16.mxu0 0
        %454 = vmatpush2.bf16.msra.mxu0 0
        %455 = vmatprep.subr.bf16.mxu0 0
        %456 = vmatpush2.bf16.msra.mxu0 0
        %457 = vmatprep.subr.bf16.mxu0 0
        %458 = vmatpush2.bf16.msra.mxu0 0
        %459 = vmatprep.mubr.bf16.mxu0 0
        %460 = vmatmul.mubr.bf16.gmra.mxu0 %v353
        %v461 = vpop.f32.mrf.mxu0
        %v462 = vadd.f32 0.0, %v461
        %v463 = vpop.f32.mrf.mxu0
        %v464 = vadd.f32 0.0, %v463
        %v465 = vpop.f32.mrf.mxu0
        %v466 = vadd.f32 0.0, %v465
        %v467 = vpop.f32.mrf.mxu0
        %v468 = vadd.f32 0.0, %v467
        %469 = vmatprep.mubr.bf16.mxu0 0
        %470 = vmatmul.mubr.bf16.gmra.mxu0 %v356
        %v471 = vpop.f32.mrf.mxu0
        %v472 = vadd.f32 0.0, %v471
        %v473 = vpop.f32.mrf.mxu0
        %v474 = vadd.f32 0.0, %v473
        %v475 = vpop.f32.mrf.mxu0
        %v476 = vadd.f32 0.0, %v475
        %v477 = vpop.f32.mrf.mxu0
        %v478 = vadd.f32 0.0, %v477
        %479 = vdwg.mxu0
        %481 = vset.pattern.permute.xlu0 0
        %482 = vperm.xlu0 %481, %v277
        %v483 = vpop.permute.xlu0 %482
        %486 = vset.pattern.permute.xlu0 0
        %487 = vperm.xlu0 %486, %v278
        %v488 = vpop.permute.xlu0 %487
        %491 = vset.pattern.permute.xlu0 0
        %492 = vperm.xlu0 %491, %v279
        %v493 = vpop.permute.xlu0 %492
        %496 = vset.pattern.permute.xlu0 0
        %497 = vperm.xlu0 %496, %v280
        %v498 = vpop.permute.xlu0 %497
        %v500 = vmul.f32 %v409, %v483
        %v501 = vmul.f32 %v411, %v483
        %v502 = vmul.f32 %v462, %v483
        %v503 = vmul.f32 %v464, %v483
        %v504 = vmul.f32 %v413, %v488
        %v505 = vmul.f32 %v415, %v488
        %v506 = vmul.f32 %v466, %v488
        %v507 = vmul.f32 %v468, %v488
        %v508 = vmul.f32 %v419, %v493
        %v509 = vmul.f32 %v421, %v493
        %v510 = vmul.f32 %v472, %v493
        %v511 = vmul.f32 %v474, %v493
        %v512 = vmul.f32 %v423, %v498
        %v513 = vmul.f32 %v425, %v498
        %v514 = vmul.f32 %v476, %v498
        %v515 = vmul.f32 %v478, %v498
        %517 = vset.pattern.permute.xlu0 0
        %518 = vperm.xlu0 %517, %v292
        %v519 = vpop.permute.xlu0 %518
        %522 = vset.pattern.permute.xlu0 0
        %523 = vperm.xlu0 %522, %v293
        %v524 = vpop.permute.xlu0 %523
        %527 = vset.pattern.permute.xlu0 0
        %528 = vperm.xlu0 %527, %v294
        %v529 = vpop.permute.xlu0 %528
        %532 = vset.pattern.permute.xlu0 0
        %533 = vperm.xlu0 %532, %v295
        %v534 = vpop.permute.xlu0 %533
        %v536 = vadd.f32 %v500, %v519
        %v537 = vadd.f32 %v501, %v519
        %v538 = vadd.f32 %v502, %v519
        %v539 = vadd.f32 %v503, %v519
        %v540 = vadd.f32 %v504, %v524
        %v541 = vadd.f32 %v505, %v524
        %v542 = vadd.f32 %v506, %v524
        %v543 = vadd.f32 %v507, %v524
        %v544 = vadd.f32 %v508, %v529
        %v545 = vadd.f32 %v509, %v529
        %v546 = vadd.f32 %v510, %v529
        %v547 = vadd.f32 %v511, %v529
        %v548 = vadd.f32 %v512, %v534
        %v549 = vadd.f32 %v513, %v534
        %v550 = vadd.f32 %v514, %v534
        %v551 = vadd.f32 %v515, %v534
        %v552 = vmax.f32 %v536, 0.0
        %v553 = vmax.f32 %v537, 0.0
        %v554 = vmax.f32 %v538, 0.0
        %v555 = vmax.f32 %v539, 0.0
        %v556 = vmax.f32 %v540, 0.0
        %v557 = vmax.f32 %v541, 0.0
        %v558 = vmax.f32 %v542, 0.0
        %v559 = vmax.f32 %v543, 0.0
        %v560 = vmax.f32 %v544, 0.0
        %v561 = vmax.f32 %v545, 0.0
        %v562 = vmax.f32 %v546, 0.0
        %v563 = vmax.f32 %v547, 0.0
        %v564 = vmax.f32 %v548, 0.0
        %v565 = vmax.f32 %v549, 0.0
        %v566 = vmax.f32 %v550, 0.0
        %v567 = vmax.f32 %v551, 0.0
        %v568 = vpack.c.bf16 %v556, %v552
        %v569 = vpack.c.bf16 %v557, %v553
        %v570 = vpack.c.bf16 %v558, %v554
        %v571 = vpack.c.bf16 %v559, %v555
        %v572 = vpack.c.bf16 %v564, %v560
        %v573 = vpack.c.bf16 %v565, %v561
        %v574 = vpack.c.bf16 %v566, %v562
        %v575 = vpack.c.bf16 %v567, %v563
        %577 = vset.pattern.permute.xlu0 0
        %578 = vperm.xlu0 %577, %v302
        %v579 = vpop.permute.xlu0 %578
        %582 = vset.pattern.permute.xlu0 0
        %583 = vperm.xlu0 %582, %v303
        %v584 = vpop.permute.xlu0 %583
        %587 = vset.pattern.permute.xlu0 0
        %588 = vperm.xlu0 %587, %v304
        %v589 = vpop.permute.xlu0 %588
        %592 = vset.pattern.permute.xlu0 0
        %593 = vperm.xlu0 %592, %v305
        %v594 = vpop.permute.xlu0 %593
        %v600 = vunpack.c.l.b16 %v258
        %v601 = vunpack.c.l.b16 %v259
        %v602 = vunpack.c.l.b16 %v260
        %v603 = vunpack.c.l.b16 %v261
        %v604 = vpack.c.b16 %v601, %v600
        %v605 = vpack.c.b16 %v603, %v602
        %vm606 = vcmask 261120
        %v608 = vsel %vm606, %v604, 0
        %v611 = vsel %vm606, %v605, 0
        %613 = vmatprep.subr.bf16.mxu0 0
        %614 = vmatpush1.bf16.msra.mxu0 0
        %615 = vmatprep.subr.bf16.mxu0 0
        %616 = vmatpush1.bf16.msra.mxu0 0
        %617 = vmatprep.subr.bf16.mxu0 0
        %618 = vmatpush1.bf16.msra.mxu0 0
        %619 = vmatprep.subr.bf16.mxu0 0
        %620 = vmatpush1.bf16.msra.mxu0 0
        %621 = vmatprep.subr.bf16.mxu0 0
        %622 = vmatpush1.bf16.msra.mxu0 0
        %623 = vmatprep.subr.bf16.mxu0 0
        %624 = vmatpush1.bf16.msra.mxu0 0
        %625 = vmatprep.subr.bf16.mxu0 %v573
        %626 = vmatpush1.bf16.msra.mxu0 %v572
        %627 = vmatprep.subr.bf16.mxu0 %v569
        %628 = vmatpush1.bf16.msra.mxu0 %v568
        %629 = vmatprep.subr.bf16.mxu0 0
        %630 = vmatpush2.bf16.msra.mxu0 0
        %631 = vmatprep.subr.bf16.mxu0 0
        %632 = vmatpush2.bf16.msra.mxu0 0
        %633 = vmatprep.subr.bf16.mxu0 0
        %634 = vmatpush2.bf16.msra.mxu0 0
        %635 = vmatprep.subr.bf16.mxu0 0
        %636 = vmatpush2.bf16.msra.mxu0 0
        %637 = vmatprep.subr.bf16.mxu0 0
        %638 = vmatpush2.bf16.msra.mxu0 0
        %639 = vmatprep.subr.bf16.mxu0 0
        %640 = vmatpush2.bf16.msra.mxu0 0
        %641 = vmatprep.subr.bf16.mxu0 0
        %642 = vmatpush2.bf16.msra.mxu0 0
        %643 = vmatprep.subr.bf16.mxu0 0
        %644 = vmatpush2.bf16.msra.mxu0 0
        %645 = vmatprep.mubr.bf16.mxu0 0
        %646 = vmatmul.mubr.bf16.gmra.mxu0 %v608
        %v647 = vpop.f32.mrf.mxu0
        %v648 = vadd.f32 %v579, %v647
        %v649 = vpop.f32.mrf.mxu0
        %v650 = vadd.f32 %v579, %v649
        %v651 = vpop.f32.mrf.mxu0
        %v652 = vadd.f32 %v584, %v651
        %v653 = vpop.f32.mrf.mxu0
        %v654 = vadd.f32 %v584, %v653
        %655 = vmatprep.mubr.bf16.mxu0 0
        %656 = vmatmul.mubr.bf16.gmra.mxu0 %v611
        %v657 = vpop.f32.mrf.mxu0
        %v658 = vadd.f32 %v589, %v657
        %v659 = vpop.f32.mrf.mxu0
        %v660 = vadd.f32 %v589, %v659
        %v661 = vpop.f32.mrf.mxu0
        %v662 = vadd.f32 %v594, %v661
        %v663 = vpop.f32.mrf.mxu0
        %v664 = vadd.f32 %v594, %v663
        %665 = vdwg.mxu0
        %666 = vmatprep.subr.bf16.mxu0 0
        %667 = vmatpush1.bf16.msra.mxu0 0
        %668 = vmatprep.subr.bf16.mxu0 0
        %669 = vmatpush1.bf16.msra.mxu0 0
        %670 = vmatprep.subr.bf16.mxu0 0
        %671 = vmatpush1.bf16.msra.mxu0 0
        %672 = vmatprep.subr.bf16.mxu0 0
        %673 = vmatpush1.bf16.msra.mxu0 0
        %674 = vmatprep.subr.bf16.mxu0 0
        %675 = vmatpush1.bf16.msra.mxu0 0
        %676 = vmatprep.subr.bf16.mxu0 0
        %677 = vmatpush1.bf16.msra.mxu0 0
        %678 = vmatprep.subr.bf16.mxu0 %v575
        %679 = vmatpush1.bf16.msra.mxu0 %v574
        %680 = vmatprep.subr.bf16.mxu0 %v571
        %681 = vmatpush1.bf16.msra.mxu0 %v570
        %682 = vmatprep.subr.bf16.mxu0 0
        %683 = vmatpush2.bf16.msra.mxu0 0
        %684 = vmatprep.subr.bf16.mxu0 0
        %685 = vmatpush2.bf16.msra.mxu0 0
        %686 = vmatprep.subr.bf16.mxu0 0
        %687 = vmatpush2.bf16.msra.mxu0 0
        %688 = vmatprep.subr.bf16.mxu0 0
        %689 = vmatpush2.bf16.msra.mxu0 0
        %690 = vmatprep.subr.bf16.mxu0 0
        %691 = vmatpush2.bf16.msra.mxu0 0
        %692 = vmatprep.subr.bf16.mxu0 0
        %693 = vmatpush2.bf16.msra.mxu0 0
        %694 = vmatprep.subr.bf16.mxu0 0
        %695 = vmatpush2.bf16.msra.mxu0 0
        %696 = vmatprep.subr.bf16.mxu0 0
        %697 = vmatpush2.bf16.msra.mxu0 0
        %698 = vmatprep.mubr.bf16.mxu0 0
        %699 = vmatmul.mubr.bf16.gmra.mxu0 %v608
        %v700 = vpop.f32.mrf.mxu0
        %v701 = vadd.f32 %v579, %v700
        %v702 = vpop.f32.mrf.mxu0
        %v703 = vadd.f32 %v579, %v702
        %v704 = vpop.f32.mrf.mxu0
        %v705 = vadd.f32 %v584, %v704
        %v706 = vpop.f32.mrf.mxu0
        %v707 = vadd.f32 %v584, %v706
        %708 = vmatprep.mubr.bf16.mxu0 0
        %709 = vmatmul.mubr.bf16.gmra.mxu0 %v611
        %v710 = vpop.f32.mrf.mxu0
        %v711 = vadd.f32 %v589, %v710
        %v712 = vpop.f32.mrf.mxu0
        %v713 = vadd.f32 %v589, %v712
        %v714 = vpop.f32.mrf.mxu0
        %v715 = vadd.f32 %v594, %v714
        %v716 = vpop.f32.mrf.mxu0
        %v717 = vadd.f32 %v594, %v716
        %718 = vdwg.mxu0
        %v719 = vmax.f32 %v648, 0.0
        %v720 = vmax.f32 %v650, 0.0
        %v721 = vmax.f32 %v701, 0.0
        %v722 = vmax.f32 %v703, 0.0
        %v723 = vmax.f32 %v652, 0.0
        %v724 = vmax.f32 %v654, 0.0
        %v725 = vmax.f32 %v705, 0.0
        %v726 = vmax.f32 %v707, 0.0
        %v727 = vmax.f32 %v658, 0.0
        %v728 = vmax.f32 %v660, 0.0
        %v729 = vmax.f32 %v711, 0.0
        %v730 = vmax.f32 %v713, 0.0
        %v731 = vmax.f32 %v662, 0.0
        %v732 = vmax.f32 %v664, 0.0
        %v733 = vmax.f32 %v715, 0.0
        %v734 = vmax.f32 %v717, 0.0
        %v735 = vpack.c.bf16 %v723, %v719
        %v736 = vpack.c.bf16 %v724, %v720
        %v737 = vpack.c.bf16 %v725, %v721
        %v738 = vpack.c.bf16 %v726, %v722
        %v739 = vpack.c.bf16 %v731, %v727
        %v740 = vpack.c.bf16 %v732, %v728
        %v741 = vpack.c.bf16 %v733, %v729
        %v742 = vpack.c.bf16 %v734, %v730
        %v747 = vunpack.c.l.b16 %v263
        %v748 = vunpack.c.l.b16 %v264
        %v749 = vunpack.c.l.b16 %v265
        %v750 = vunpack.c.l.b16 %v266
        %v751 = vpack.c.b16 %v748, %v747
        %v752 = vpack.c.b16 %v750, %v749
        %v754 = vsel %vm606, %v751, 0
        %v757 = vsel %vm606, %v752, 0
        %759 = vmatprep.subr.bf16.mxu0 0
        %760 = vmatpush1.bf16.msra.mxu0 0
        %761 = vmatprep.subr.bf16.mxu0 0
        %762 = vmatpush1.bf16.msra.mxu0 0
        %763 = vmatprep.subr.bf16.mxu0 0
        %764 = vmatpush1.bf16.msra.mxu0 0
        %765 = vmatprep.subr.bf16.mxu0 0
        %766 = vmatpush1.bf16.msra.mxu0 0
        %767 = vmatprep.subr.bf16.mxu0 0
        %768 = vmatpush1.bf16.msra.mxu0 0
        %769 = vmatprep.subr.bf16.mxu0 0
        %770 = vmatpush1.bf16.msra.mxu0 0
        %771 = vmatprep.subr.bf16.mxu0 %v740
        %772 = vmatpush1.bf16.msra.mxu0 %v739
        %773 = vmatprep.subr.bf16.mxu0 %v736
        %774 = vmatpush1.bf16.msra.mxu0 %v735
        %775 = vmatprep.subr.bf16.mxu0 0
        %776 = vmatpush2.bf16.msra.mxu0 0
        %777 = vmatprep.subr.bf16.mxu0 0
        %778 = vmatpush2.bf16.msra.mxu0 0
        %779 = vmatprep.subr.bf16.mxu0 0
        %780 = vmatpush2.bf16.msra.mxu0 0
        %781 = vmatprep.subr.bf16.mxu0 0
        %782 = vmatpush2.bf16.msra.mxu0 0
        %783 = vmatprep.subr.bf16.mxu0 0
        %784 = vmatpush2.bf16.msra.mxu0 0
        %785 = vmatprep.subr.bf16.mxu0 0
        %786 = vmatpush2.bf16.msra.mxu0 0
        %787 = vmatprep.subr.bf16.mxu0 0
        %788 = vmatpush2.bf16.msra.mxu0 0
        %789 = vmatprep.subr.bf16.mxu0 0
        %790 = vmatpush2.bf16.msra.mxu0 0
        %791 = vmatprep.mubr.bf16.mxu0 0
        %792 = vmatmul.mubr.bf16.gmra.mxu0 %v754
        %v793 = vpop.f32.mrf.mxu0
        %v794 = vadd.f32 0.0, %v793
        %v795 = vpop.f32.mrf.mxu0
        %v796 = vadd.f32 0.0, %v795
        %v797 = vpop.f32.mrf.mxu0
        %v798 = vadd.f32 0.0, %v797
        %v799 = vpop.f32.mrf.mxu0
        %v800 = vadd.f32 0.0, %v799
        %801 = vmatprep.mubr.bf16.mxu0 0
        %802 = vmatmul.mubr.bf16.gmra.mxu0 %v757
        %v803 = vpop.f32.mrf.mxu0
        %v804 = vadd.f32 0.0, %v803
        %v805 = vpop.f32.mrf.mxu0
        %v806 = vadd.f32 0.0, %v805
        %v807 = vpop.f32.mrf.mxu0
        %v808 = vadd.f32 0.0, %v807
        %v809 = vpop.f32.mrf.mxu0
        %v810 = vadd.f32 0.0, %v809
        %811 = vdwg.mxu0
        %812 = vmatprep.subr.bf16.mxu0 0
        %813 = vmatpush1.bf16.msra.mxu0 0
        %814 = vmatprep.subr.bf16.mxu0 0
        %815 = vmatpush1.bf16.msra.mxu0 0
        %816 = vmatprep.subr.bf16.mxu0 0
        %817 = vmatpush1.bf16.msra.mxu0 0
        %818 = vmatprep.subr.bf16.mxu0 0
        %819 = vmatpush1.bf16.msra.mxu0 0
        %820 = vmatprep.subr.bf16.mxu0 0
        %821 = vmatpush1.bf16.msra.mxu0 0
        %822 = vmatprep.subr.bf16.mxu0 0
        %823 = vmatpush1.bf16.msra.mxu0 0
        %824 = vmatprep.subr.bf16.mxu0 %v742
        %825 = vmatpush1.bf16.msra.mxu0 %v741
        %826 = vmatprep.subr.bf16.mxu0 %v738
        %827 = vmatpush1.bf16.msra.mxu0 %v737
        %828 = vmatprep.subr.bf16.mxu0 0
        %829 = vmatpush2.bf16.msra.mxu0 0
        %830 = vmatprep.subr.bf16.mxu0 0
        %831 = vmatpush2.bf16.msra.mxu0 0
        %832 = vmatprep.subr.bf16.mxu0 0
        %833 = vmatpush2.bf16.msra.mxu0 0
        %834 = vmatprep.subr.bf16.mxu0 0
        %835 = vmatpush2.bf16.msra.mxu0 0
        %836 = vmatprep.subr.bf16.mxu0 0
        %837 = vmatpush2.bf16.msra.mxu0 0
        %838 = vmatprep.subr.bf16.mxu0 0
        %839 = vmatpush2.bf16.msra.mxu0 0
        %840 = vmatprep.subr.bf16.mxu0 0
        %841 = vmatpush2.bf16.msra.mxu0 0
        %842 = vmatprep.subr.bf16.mxu0 0
        %843 = vmatpush2.bf16.msra.mxu0 0
        %844 = vmatprep.mubr.bf16.mxu0 0
        %845 = vmatmul.mubr.bf16.gmra.mxu0 %v754
        %v846 = vpop.f32.mrf.mxu0
        %v847 = vadd.f32 0.0, %v846
        %v848 = vpop.f32.mrf.mxu0
        %v849 = vadd.f32 0.0, %v848
        %v850 = vpop.f32.mrf.mxu0
        %v851 = vadd.f32 0.0, %v850
        %v852 = vpop.f32.mrf.mxu0
        %v853 = vadd.f32 0.0, %v852
        %854 = vmatprep.mubr.bf16.mxu0 0
        %855 = vmatmul.mubr.bf16.gmra.mxu0 %v757
        %v856 = vpop.f32.mrf.mxu0
        %v857 = vadd.f32 0.0, %v856
        %v858 = vpop.f32.mrf.mxu0
        %v859 = vadd.f32 0.0, %v858
        %v860 = vpop.f32.mrf.mxu0
        %v861 = vadd.f32 0.0, %v860
        %v862 = vpop.f32.mrf.mxu0
        %v863 = vadd.f32 0.0, %v862
        %864 = vdwg.mxu0
        %v865 = vadd.f32 %v409, %v794
        %v866 = vadd.f32 %v411, %v796
        %v867 = vadd.f32 %v462, %v847
        %v868 = vadd.f32 %v464, %v849
        %v869 = vadd.f32 %v413, %v798
        %v870 = vadd.f32 %v415, %v800
        %v871 = vadd.f32 %v466, %v851
        %v872 = vadd.f32 %v468, %v853
        %v873 = vadd.f32 %v419, %v804
        %v874 = vadd.f32 %v421, %v806
        %v875 = vadd.f32 %v472, %v857
        %v876 = vadd.f32 %v474, %v859
        %v877 = vadd.f32 %v423, %v808
        %v878 = vadd.f32 %v425, %v810
        %v879 = vadd.f32 %v476, %v861
        %v880 = vadd.f32 %v478, %v863
        %882 = vset.pattern.permute.xlu0 0
        %883 = vperm.xlu0 %882, %v282
        %v884 = vpop.permute.xlu0 %883
        %887 = vset.pattern.permute.xlu0 0
        %888 = vperm.xlu0 %887, %v283
        %v889 = vpop.permute.xlu0 %888
        %892 = vset.pattern.permute.xlu0 0
        %893 = vperm.xlu0 %892, %v284
        %v894 = vpop.permute.xlu0 %893
        %897 = vset.pattern.permute.xlu0 0
        %898 = vperm.xlu0 %897, %v285
        %v899 = vpop.permute.xlu0 %898
        %v901 = vmul.f32 %v865, %v884
        %v902 = vmul.f32 %v866, %v884
        %v903 = vmul.f32 %v867, %v884
        %v904 = vmul.f32 %v868, %v884
        %v905 = vmul.f32 %v869, %v889
        %v906 = vmul.f32 %v870, %v889
        %v907 = vmul.f32 %v871, %v889
        %v908 = vmul.f32 %v872, %v889
        %v909 = vmul.f32 %v873, %v894
        %v910 = vmul.f32 %v874, %v894
        %v911 = vmul.f32 %v875, %v894
        %v912 = vmul.f32 %v876, %v894
        %v913 = vmul.f32 %v877, %v899
        %v914 = vmul.f32 %v878, %v899
        %v915 = vmul.f32 %v879, %v899
        %v916 = vmul.f32 %v880, %v899
        %918 = vset.pattern.permute.xlu0 0
        %919 = vperm.xlu0 %918, %v297
        %v920 = vpop.permute.xlu0 %919
        %923 = vset.pattern.permute.xlu0 0
        %924 = vperm.xlu0 %923, %v298
        %v925 = vpop.permute.xlu0 %924
        %928 = vset.pattern.permute.xlu0 0
        %929 = vperm.xlu0 %928, %v299
        %v930 = vpop.permute.xlu0 %929
        %933 = vset.pattern.permute.xlu0 0
        %934 = vperm.xlu0 %933, %v300
        %v935 = vpop.permute.xlu0 %934
        %v937 = vadd.f32 %v901, %v920
        %v938 = vadd.f32 %v902, %v920
        %v939 = vadd.f32 %v903, %v920
        %v940 = vadd.f32 %v904, %v920
        %v941 = vadd.f32 %v905, %v925
        %v942 = vadd.f32 %v906, %v925
        %v943 = vadd.f32 %v907, %v925
        %v944 = vadd.f32 %v908, %v925
        %v945 = vadd.f32 %v909, %v930
        %v946 = vadd.f32 %v910, %v930
        %v947 = vadd.f32 %v911, %v930
        %v948 = vadd.f32 %v912, %v930
        %v949 = vadd.f32 %v913, %v935
        %v950 = vadd.f32 %v914, %v935
        %v951 = vadd.f32 %v915, %v935
        %v952 = vadd.f32 %v916, %v935
        %v953 = vmax.f32 %v937, 0.0
        %v954 = vmax.f32 %v938, 0.0
        %v955 = vmax.f32 %v939, 0.0
        %v956 = vmax.f32 %v940, 0.0
        %v957 = vmax.f32 %v941, 0.0
        %v958 = vmax.f32 %v942, 0.0
        %v959 = vmax.f32 %v943, 0.0
        %v960 = vmax.f32 %v944, 0.0
        %v961 = vmax.f32 %v945, 0.0
        %v962 = vmax.f32 %v946, 0.0
        %v963 = vmax.f32 %v947, 0.0
        %v964 = vmax.f32 %v948, 0.0
        %v965 = vmax.f32 %v949, 0.0
        %v966 = vmax.f32 %v950, 0.0
        %v967 = vmax.f32 %v951, 0.0
        %v968 = vmax.f32 %v952, 0.0
        %v969 = vpack.c.bf16 %v957, %v953
        %v970 = vpack.c.bf16 %v958, %v954
        %v971 = vpack.c.bf16 %v959, %v955
        %v972 = vpack.c.bf16 %v960, %v956
        %v973 = vpack.c.bf16 %v965, %v961
        %v974 = vpack.c.bf16 %v966, %v962
        %v975 = vpack.c.bf16 %v967, %v963
        %v976 = vpack.c.bf16 %v968, %v964
        %978 = vset.pattern.permute.xlu0 0
        %979 = vperm.xlu0 %978, %v307
        %v980 = vpop.permute.xlu0 %979
        %983 = vset.pattern.permute.xlu0 0
        %984 = vperm.xlu0 %983, %v308
        %v985 = vpop.permute.xlu0 %984
        %988 = vset.pattern.permute.xlu0 0
        %989 = vperm.xlu0 %988, %v309
        %v990 = vpop.permute.xlu0 %989
        %993 = vset.pattern.permute.xlu0 0
        %994 = vperm.xlu0 %993, %v310
        %v995 = vpop.permute.xlu0 %994
        %v1001 = vunpack.c.l.b16 %v268
        %v1002 = vunpack.c.l.b16 %v269
        %v1003 = vunpack.c.l.b16 %v270
        %v1004 = vunpack.c.l.b16 %v271
        %v1005 = vpack.c.b16 %v1002, %v1001
        %v1006 = vpack.c.b16 %v1004, %v1003
        %v1008 = vsel %vm606, %v1005, 0
        %v1011 = vsel %vm606, %v1006, 0
        %1013 = vmatprep.subr.bf16.mxu0 0
        %1014 = vmatpush1.bf16.msra.mxu0 0
        %1015 = vmatprep.subr.bf16.mxu0 0
        %1016 = vmatpush1.bf16.msra.mxu0 0
        %1017 = vmatprep.subr.bf16.mxu0 0
        %1018 = vmatpush1.bf16.msra.mxu0 0
        %1019 = vmatprep.subr.bf16.mxu0 0
        %1020 = vmatpush1.bf16.msra.mxu0 0
        %1021 = vmatprep.subr.bf16.mxu0 0
        %1022 = vmatpush1.bf16.msra.mxu0 0
        %1023 = vmatprep.subr.bf16.mxu0 0
        %1024 = vmatpush1.bf16.msra.mxu0 0
        %1025 = vmatprep.subr.bf16.mxu0 %v974
        %1026 = vmatpush1.bf16.msra.mxu0 %v973
        %1027 = vmatprep.subr.bf16.mxu0 %v970
        %1028 = vmatpush1.bf16.msra.mxu0 %v969
        %1029 = vmatprep.subr.bf16.mxu0 0
        %1030 = vmatpush2.bf16.msra.mxu0 0
        %1031 = vmatprep.subr.bf16.mxu0 0
        %1032 = vmatpush2.bf16.msra.mxu0 0
        %1033 = vmatprep.subr.bf16.mxu0 0
        %1034 = vmatpush2.bf16.msra.mxu0 0
        %1035 = vmatprep.subr.bf16.mxu0 0
        %1036 = vmatpush2.bf16.msra.mxu0 0
        %1037 = vmatprep.subr.bf16.mxu0 0
        %1038 = vmatpush2.bf16.msra.mxu0 0
        %1039 = vmatprep.subr.bf16.mxu0 0
        %1040 = vmatpush2.bf16.msra.mxu0 0
        %1041 = vmatprep.subr.bf16.mxu0 0
        %1042 = vmatpush2.bf16.msra.mxu0 0
        %1043 = vmatprep.subr.bf16.mxu0 0
        %1044 = vmatpush2.bf16.msra.mxu0 0
        %1045 = vmatprep.mubr.bf16.mxu0 0
        %1046 = vmatmul.mubr.bf16.gmra.mxu0 %v1008
        %v1047 = vpop.f32.mrf.mxu0
        %v1048 = vadd.f32 %v980, %v1047
        %v1049 = vpop.f32.mrf.mxu0
        %v1050 = vadd.f32 %v980, %v1049
        %v1051 = vpop.f32.mrf.mxu0
        %v1052 = vadd.f32 %v985, %v1051
        %v1053 = vpop.f32.mrf.mxu0
        %v1054 = vadd.f32 %v985, %v1053
        %1055 = vmatprep.mubr.bf16.mxu0 0
        %1056 = vmatmul.mubr.bf16.gmra.mxu0 %v1011
        %v1057 = vpop.f32.mrf.mxu0
        %v1058 = vadd.f32 %v990, %v1057
        %v1059 = vpop.f32.mrf.mxu0
        %v1060 = vadd.f32 %v990, %v1059
        %v1061 = vpop.f32.mrf.mxu0
        %v1062 = vadd.f32 %v995, %v1061
        %v1063 = vpop.f32.mrf.mxu0
        %v1064 = vadd.f32 %v995, %v1063
        %1065 = vdwg.mxu0
        %1066 = vmatprep.subr.bf16.mxu0 0
        %1067 = vmatpush1.bf16.msra.mxu0 0
        %1068 = vmatprep.subr.bf16.mxu0 0
        %1069 = vmatpush1.bf16.msra.mxu0 0
        %1070 = vmatprep.subr.bf16.mxu0 0
        %1071 = vmatpush1.bf16.msra.mxu0 0
        %1072 = vmatprep.subr.bf16.mxu0 0
        %1073 = vmatpush1.bf16.msra.mxu0 0
        %1074 = vmatprep.subr.bf16.mxu0 0
        %1075 = vmatpush1.bf16.msra.mxu0 0
        %1076 = vmatprep.subr.bf16.mxu0 0
        %1077 = vmatpush1.bf16.msra.mxu0 0
        %1078 = vmatprep.subr.bf16.mxu0 %v976
        %1079 = vmatpush1.bf16.msra.mxu0 %v975
        %1080 = vmatprep.subr.bf16.mxu0 %v972
        %1081 = vmatpush1.bf16.msra.mxu0 %v971
        %1082 = vmatprep.subr.bf16.mxu0 0
        %1083 = vmatpush2.bf16.msra.mxu0 0
        %1084 = vmatprep.subr.bf16.mxu0 0
        %1085 = vmatpush2.bf16.msra.mxu0 0
        %1086 = vmatprep.subr.bf16.mxu0 0
        %1087 = vmatpush2.bf16.msra.mxu0 0
        %1088 = vmatprep.subr.bf16.mxu0 0
        %1089 = vmatpush2.bf16.msra.mxu0 0
        %1090 = vmatprep.subr.bf16.mxu0 0
        %1091 = vmatpush2.bf16.msra.mxu0 0
        %1092 = vmatprep.subr.bf16.mxu0 0
        %1093 = vmatpush2.bf16.msra.mxu0 0
        %1094 = vmatprep.subr.bf16.mxu0 0
        %1095 = vmatpush2.bf16.msra.mxu0 0
        %1096 = vmatprep.subr.bf16.mxu0 0
        %1097 = vmatpush2.bf16.msra.mxu0 0
        %1098 = vmatprep.mubr.bf16.mxu0 0
        %1099 = vmatmul.mubr.bf16.gmra.mxu0 %v1008
        %v1100 = vpop.f32.mrf.mxu0
        %v1101 = vadd.f32 %v980, %v1100
        %v1102 = vpop.f32.mrf.mxu0
        %v1103 = vadd.f32 %v980, %v1102
        %v1104 = vpop.f32.mrf.mxu0
        %v1105 = vadd.f32 %v985, %v1104
        %v1106 = vpop.f32.mrf.mxu0
        %v1107 = vadd.f32 %v985, %v1106
        %1108 = vmatprep.mubr.bf16.mxu0 0
        %1109 = vmatmul.mubr.bf16.gmra.mxu0 %v1011
        %v1110 = vpop.f32.mrf.mxu0
        %v1111 = vadd.f32 %v990, %v1110
        %v1112 = vpop.f32.mrf.mxu0
        %v1113 = vadd.f32 %v990, %v1112
        %v1114 = vpop.f32.mrf.mxu0
        %v1115 = vadd.f32 %v995, %v1114
        %v1116 = vpop.f32.mrf.mxu0
        %v1117 = vadd.f32 %v995, %v1116
        %1118 = vdwg.mxu0
        %v1119 = vmax.f32 %v1048, 0.0
        %v1120 = vmax.f32 %v1050, 0.0
        %v1121 = vmax.f32 %v1101, 0.0
        %v1122 = vmax.f32 %v1103, 0.0
        %v1123 = vmax.f32 %v1052, 0.0
        %v1124 = vmax.f32 %v1054, 0.0
        %v1125 = vmax.f32 %v1105, 0.0
        %v1126 = vmax.f32 %v1107, 0.0
        %v1127 = vmax.f32 %v1058, 0.0
        %v1128 = vmax.f32 %v1060, 0.0
        %v1129 = vmax.f32 %v1111, 0.0
        %v1130 = vmax.f32 %v1113, 0.0
        %v1131 = vmax.f32 %v1062, 0.0
        %v1132 = vmax.f32 %v1064, 0.0
        %v1133 = vmax.f32 %v1115, 0.0
        %v1134 = vmax.f32 %v1117, 0.0
        %v1135 = vpack.c.bf16 %v1123, %v1119
        %v1136 = vpack.c.bf16 %v1124, %v1120
        %v1137 = vpack.c.bf16 %v1125, %v1121
        %v1138 = vpack.c.bf16 %v1126, %v1122
        %v1139 = vpack.c.bf16 %v1131, %v1127
        %v1140 = vpack.c.bf16 %v1132, %v1128
        %v1141 = vpack.c.bf16 %v1133, %v1129
        %v1142 = vpack.c.bf16 %v1134, %v1130
        %v1147 = vunpack.c.l.b16 %v273
        %v1148 = vunpack.c.l.b16 %v274
        %v1149 = vunpack.c.l.b16 %v275
        %v1150 = vunpack.c.l.b16 %v276
        %v1151 = vpack.c.b16 %v1148, %v1147
        %v1152 = vpack.c.b16 %v1150, %v1149
        %v1154 = vsel %vm606, %v1151, 0
        %v1157 = vsel %vm606, %v1152, 0
        %1159 = vmatprep.subr.bf16.mxu0 0
        %1160 = vmatpush1.bf16.msra.mxu0 0
        %1161 = vmatprep.subr.bf16.mxu0 0
        %1162 = vmatpush1.bf16.msra.mxu0 0
        %1163 = vmatprep.subr.bf16.mxu0 0
        %1164 = vmatpush1.bf16.msra.mxu0 0
        %1165 = vmatprep.subr.bf16.mxu0 0
        %1166 = vmatpush1.bf16.msra.mxu0 0
        %1167 = vmatprep.subr.bf16.mxu0 0
        %1168 = vmatpush1.bf16.msra.mxu0 0
        %1169 = vmatprep.subr.bf16.mxu0 0
        %1170 = vmatpush1.bf16.msra.mxu0 0
        %1171 = vmatprep.subr.bf16.mxu0 %v1140
        %1172 = vmatpush1.bf16.msra.mxu0 %v1139
        %1173 = vmatprep.subr.bf16.mxu0 %v1136
        %1174 = vmatpush1.bf16.msra.mxu0 %v1135
        %1175 = vmatprep.subr.bf16.mxu0 0
        %1176 = vmatpush2.bf16.msra.mxu0 0
        %1177 = vmatprep.subr.bf16.mxu0 0
        %1178 = vmatpush2.bf16.msra.mxu0 0
        %1179 = vmatprep.subr.bf16.mxu0 0
        %1180 = vmatpush2.bf16.msra.mxu0 0
        %1181 = vmatprep.subr.bf16.mxu0 0
        %1182 = vmatpush2.bf16.msra.mxu0 0
        %1183 = vmatprep.subr.bf16.mxu0 0
        %1184 = vmatpush2.bf16.msra.mxu0 0
        %1185 = vmatprep.subr.bf16.mxu0 0
        %1186 = vmatpush2.bf16.msra.mxu0 0
        %1187 = vmatprep.subr.bf16.mxu0 0
        %1188 = vmatpush2.bf16.msra.mxu0 0
        %1189 = vmatprep.subr.bf16.mxu0 0
        %1190 = vmatpush2.bf16.msra.mxu0 0
        %1191 = vmatprep.mubr.bf16.mxu0 0
        %1192 = vmatmul.mubr.bf16.gmra.mxu0 %v1154
        %v1193 = vpop.f32.mrf.mxu0
        %v1194 = vadd.f32 0.0, %v1193
        %v1195 = vpop.f32.mrf.mxu0
        %v1196 = vadd.f32 0.0, %v1195
        %v1197 = vpop.f32.mrf.mxu0
        %v1198 = vadd.f32 0.0, %v1197
        %v1199 = vpop.f32.mrf.mxu0
        %v1200 = vadd.f32 0.0, %v1199
        %1201 = vmatprep.mubr.bf16.mxu0 0
        %1202 = vmatmul.mubr.bf16.gmra.mxu0 %v1157
        %v1203 = vpop.f32.mrf.mxu0
        %v1204 = vadd.f32 0.0, %v1203
        %v1205 = vpop.f32.mrf.mxu0
        %v1206 = vadd.f32 0.0, %v1205
        %v1207 = vpop.f32.mrf.mxu0
        %v1208 = vadd.f32 0.0, %v1207
        %v1209 = vpop.f32.mrf.mxu0
        %v1210 = vadd.f32 0.0, %v1209
        %1211 = vdwg.mxu0
        %1212 = vmatprep.subr.bf16.mxu0 0
        %1213 = vmatpush1.bf16.msra.mxu0 0
        %1214 = vmatprep.subr.bf16.mxu0 0
        %1215 = vmatpush1.bf16.msra.mxu0 0
        %1216 = vmatprep.subr.bf16.mxu0 0
        %1217 = vmatpush1.bf16.msra.mxu0 0
        %1218 = vmatprep.subr.bf16.mxu0 0
        %1219 = vmatpush1.bf16.msra.mxu0 0
        %1220 = vmatprep.subr.bf16.mxu0 0
        %1221 = vmatpush1.bf16.msra.mxu0 0
        %1222 = vmatprep.subr.bf16.mxu0 0
        %1223 = vmatpush1.bf16.msra.mxu0 0
        %1224 = vmatprep.subr.bf16.mxu0 %v1142
        %1225 = vmatpush1.bf16.msra.mxu0 %v1141
        %1226 = vmatprep.subr.bf16.mxu0 %v1138
        %1227 = vmatpush1.bf16.msra.mxu0 %v1137
        %1228 = vmatprep.subr.bf16.mxu0 0
        %1229 = vmatpush2.bf16.msra.mxu0 0
        %1230 = vmatprep.subr.bf16.mxu0 0
        %1231 = vmatpush2.bf16.msra.mxu0 0
        %1232 = vmatprep.subr.bf16.mxu0 0
        %1233 = vmatpush2.bf16.msra.mxu0 0
        %1234 = vmatprep.subr.bf16.mxu0 0
        %1235 = vmatpush2.bf16.msra.mxu0 0
        %1236 = vmatprep.subr.bf16.mxu0 0
        %1237 = vmatpush2.bf16.msra.mxu0 0
        %1238 = vmatprep.subr.bf16.mxu0 0
        %1239 = vmatpush2.bf16.msra.mxu0 0
        %1240 = vmatprep.subr.bf16.mxu0 0
        %1241 = vmatpush2.bf16.msra.mxu0 0
        %1242 = vmatprep.subr.bf16.mxu0 0
        %1243 = vmatpush2.bf16.msra.mxu0 0
        %1244 = vmatprep.mubr.bf16.mxu0 0
        %1245 = vmatmul.mubr.bf16.gmra.mxu0 %v1154
        %v1246 = vpop.f32.mrf.mxu0
        %v1247 = vadd.f32 0.0, %v1246
        %v1248 = vpop.f32.mrf.mxu0
        %v1249 = vadd.f32 0.0, %v1248
        %v1250 = vpop.f32.mrf.mxu0
        %v1251 = vadd.f32 0.0, %v1250
        %v1252 = vpop.f32.mrf.mxu0
        %v1253 = vadd.f32 0.0, %v1252
        %1254 = vmatprep.mubr.bf16.mxu0 0
        %1255 = vmatmul.mubr.bf16.gmra.mxu0 %v1157
        %v1256 = vpop.f32.mrf.mxu0
        %v1257 = vadd.f32 0.0, %v1256
        %v1258 = vpop.f32.mrf.mxu0
        %v1259 = vadd.f32 0.0, %v1258
        %v1260 = vpop.f32.mrf.mxu0
        %v1261 = vadd.f32 0.0, %v1260
        %v1262 = vpop.f32.mrf.mxu0
        %v1263 = vadd.f32 0.0, %v1262
        %1264 = vdwg.mxu0
        %v1265 = vadd.f32 %v865, %v1194
        %v1266 = vadd.f32 %v866, %v1196
        %v1267 = vadd.f32 %v867, %v1247
        %v1268 = vadd.f32 %v868, %v1249
        %v1269 = vadd.f32 %v869, %v1198
        %v1270 = vadd.f32 %v870, %v1200
        %v1271 = vadd.f32 %v871, %v1251
        %v1272 = vadd.f32 %v872, %v1253
        %v1273 = vadd.f32 %v873, %v1204
        %v1274 = vadd.f32 %v874, %v1206
        %v1275 = vadd.f32 %v875, %v1257
        %v1276 = vadd.f32 %v876, %v1259
        %v1277 = vadd.f32 %v877, %v1208
        %v1278 = vadd.f32 %v878, %v1210
        %v1279 = vadd.f32 %v879, %v1261
        %v1280 = vadd.f32 %v880, %v1263
        %1282 = vset.pattern.permute.xlu0 0
        %1283 = vperm.xlu0 %1282, %v287
        %v1284 = vpop.permute.xlu0 %1283
        %1287 = vset.pattern.permute.xlu0 0
        %1288 = vperm.xlu0 %1287, %v288
        %v1289 = vpop.permute.xlu0 %1288
        %1292 = vset.pattern.permute.xlu0 0
        %1293 = vperm.xlu0 %1292, %v289
        %v1294 = vpop.permute.xlu0 %1293
        %1297 = vset.pattern.permute.xlu0 0
        %1298 = vperm.xlu0 %1297, %v290
        %v1299 = vpop.permute.xlu0 %1298
        %v1301 = vmul.f32 %v1265, %v1284
        %v1302 = vmul.f32 %v1266, %v1284
        %v1303 = vmul.f32 %v1267, %v1284
        %v1304 = vmul.f32 %v1268, %v1284
        %v1305 = vmul.f32 %v1269, %v1289
        %v1306 = vmul.f32 %v1270, %v1289
        %v1307 = vmul.f32 %v1271, %v1289
        %v1308 = vmul.f32 %v1272, %v1289
        %v1309 = vmul.f32 %v1273, %v1294
        %v1310 = vmul.f32 %v1274, %v1294
        %v1311 = vmul.f32 %v1275, %v1294
        %v1312 = vmul.f32 %v1276, %v1294
        %v1313 = vmul.f32 %v1277, %v1299
        %v1314 = vmul.f32 %v1278, %v1299
        %v1315 = vmul.f32 %v1279, %v1299
        %v1316 = vmul.f32 %v1280, %v1299
        %1318 = vset.pattern.permute.xlu0 0
        %1319 = vperm.xlu0 %1318, %v312
        %v1320 = vpop.permute.xlu0 %1319
        %1323 = vset.pattern.permute.xlu0 0
        %1324 = vperm.xlu0 %1323, %v313
        %v1325 = vpop.permute.xlu0 %1324
        %1328 = vset.pattern.permute.xlu0 0
        %1329 = vperm.xlu0 %1328, %v314
        %v1330 = vpop.permute.xlu0 %1329
        %1333 = vset.pattern.permute.xlu0 0
        %1334 = vperm.xlu0 %1333, %v315
        %v1335 = vpop.permute.xlu0 %1334
        %v1337 = vadd.f32 %v1301, %v1320
        %v1338 = vadd.f32 %v1302, %v1320
        %v1339 = vadd.f32 %v1303, %v1320
        %v1340 = vadd.f32 %v1304, %v1320
        %v1341 = vadd.f32 %v1305, %v1325
        %v1342 = vadd.f32 %v1306, %v1325
        %v1343 = vadd.f32 %v1307, %v1325
        %v1344 = vadd.f32 %v1308, %v1325
        %v1345 = vadd.f32 %v1309, %v1330
        %v1346 = vadd.f32 %v1310, %v1330
        %v1347 = vadd.f32 %v1311, %v1330
        %v1348 = vadd.f32 %v1312, %v1330
        %v1349 = vadd.f32 %v1313, %v1335
        %v1350 = vadd.f32 %v1314, %v1335
        %v1351 = vadd.f32 %v1315, %v1335
        %v1352 = vadd.f32 %v1316, %v1335
        %v1353 = vmax.f32 %v1337, 0.0
        %v1354 = vmax.f32 %v1338, 0.0
        %v1355 = vmax.f32 %v1339, 0.0
        %v1356 = vmax.f32 %v1340, 0.0
        %v1357 = vmax.f32 %v1341, 0.0
        %v1358 = vmax.f32 %v1342, 0.0
        %v1359 = vmax.f32 %v1343, 0.0
        %v1360 = vmax.f32 %v1344, 0.0
        %v1361 = vmax.f32 %v1345, 0.0
        %v1362 = vmax.f32 %v1346, 0.0
        %v1363 = vmax.f32 %v1347, 0.0
        %v1364 = vmax.f32 %v1348, 0.0
        %v1365 = vmax.f32 %v1349, 0.0
        %v1366 = vmax.f32 %v1350, 0.0
        %v1367 = vmax.f32 %v1351, 0.0
        %v1368 = vmax.f32 %v1352, 0.0
        %v1369 = vpack.c.bf16 %v1357, %v1353
        %v1370 = vpack.c.bf16 %v1358, %v1354
        %v1371 = vpack.c.bf16 %v1359, %v1355
        %v1372 = vpack.c.bf16 %v1360, %v1356
        %v1373 = vpack.c.bf16 %v1365, %v1361
        %v1374 = vpack.c.bf16 %v1366, %v1362
        %v1375 = vpack.c.bf16 %v1367, %v1363
        %v1376 = vpack.c.bf16 %v1368, %v1364
        %1378 = vset.pattern.permute.xlu0 0
        %1379 = vperm.xlu0 %1378, %v319
        %v1380 = vpop.permute.xlu0 %1379
        %1383 = vset.pattern.permute.xlu0 0
        %1384 = vperm.xlu0 %1383, %v320
        %v1385 = vpop.permute.xlu0 %1384
        %1388 = vset.pattern.permute.xlu0 0
        %1389 = vperm.xlu0 %1388, %v321
        %v1390 = vpop.permute.xlu0 %1389
        %v1395 = vunpack.c.l.b16 %v316
        %v1396 = vunpack.c.l.b16 %v317
        %v1397 = vunpack.c.l.b16 %v318
        %v1398 = vpack.c.b16 %v1396, %v1395
        %v1399 = vpack.c.b16 %v1397, %v1397
        %v1401 = vsel %vm606, %v1398, 0
        %v1404 = vsel %vm606, %v1399, 0
        %1406 = vmatprep.subr.bf16.mxu0 0
        %1407 = vmatpush1.bf16.msra.mxu0 0
        %1408 = vmatprep.subr.bf16.mxu0 0
        %1409 = vmatpush1.bf16.msra.mxu0 0
        %1410 = vmatprep.subr.bf16.mxu0 0
        %1411 = vmatpush1.bf16.msra.mxu0 0
        %1412 = vmatprep.subr.bf16.mxu0 0
        %1413 = vmatpush1.bf16.msra.mxu0 0
        %1414 = vmatprep.subr.bf16.mxu0 0
        %1415 = vmatpush1.bf16.msra.mxu0 0
        %1416 = vmatprep.subr.bf16.mxu0 0
        %1417 = vmatpush1.bf16.msra.mxu0 0
        %1418 = vmatprep.subr.bf16.mxu0 %v1374
        %1419 = vmatpush1.bf16.msra.mxu0 %v1373
        %1420 = vmatprep.subr.bf16.mxu0 %v1370
        %1421 = vmatpush1.bf16.msra.mxu0 %v1369
        %1422 = vmatprep.subr.bf16.mxu0 0
        %1423 = vmatpush2.bf16.msra.mxu0 0
        %1424 = vmatprep.subr.bf16.mxu0 0
        %1425 = vmatpush2.bf16.msra.mxu0 0
        %1426 = vmatprep.subr.bf16.mxu0 0
        %1427 = vmatpush2.bf16.msra.mxu0 0
        %1428 = vmatprep.subr.bf16.mxu0 0
        %1429 = vmatpush2.bf16.msra.mxu0 0
        %1430 = vmatprep.subr.bf16.mxu0 0
        %1431 = vmatpush2.bf16.msra.mxu0 0
        %1432 = vmatprep.subr.bf16.mxu0 0
        %1433 = vmatpush2.bf16.msra.mxu0 0
        %1434 = vmatprep.subr.bf16.mxu0 0
        %1435 = vmatpush2.bf16.msra.mxu0 0
        %1436 = vmatprep.subr.bf16.mxu0 0
        %1437 = vmatpush2.bf16.msra.mxu0 0
        %1438 = vmatprep.mubr.bf16.mxu0 0
        %1439 = vmatmul.mubr.bf16.gmra.mxu0 %v1401
        %v1440 = vpop.f32.mrf.mxu0
        %v1441 = vadd.f32 %v1380, %v1440
        %v1442 = vpop.f32.mrf.mxu0
        %v1443 = vadd.f32 %v1380, %v1442
        %v1444 = vpop.f32.mrf.mxu0
        %v1445 = vadd.f32 %v1385, %v1444
        %v1446 = vpop.f32.mrf.mxu0
        %v1447 = vadd.f32 %v1385, %v1446
        %1448 = vmatprep.mubr.bf16.mxu0 0
        %1449 = vmatmul.mubr.bf16.gmra.mxu0 %v1404
        %v1450 = vpop.f32.mrf.mxu0
        %v1451 = vadd.f32 %v1390, %v1450
        %v1452 = vpop.f32.mrf.mxu0
        %v1453 = vadd.f32 %v1390, %v1452
        %v1454 = vpop.f32.mrf.mxu0
        %v1455 = vpop.f32.mrf.mxu0
        %1456 = vdwg.mxu0
        %1457 = vmatprep.subr.bf16.mxu0 0
        %1458 = vmatpush1.bf16.msra.mxu0 0
        %1459 = vmatprep.subr.bf16.mxu0 0
        %1460 = vmatpush1.bf16.msra.mxu0 0
        %1461 = vmatprep.subr.bf16.mxu0 0
        %1462 = vmatpush1.bf16.msra.mxu0 0
        %1463 = vmatprep.subr.bf16.mxu0 0
        %1464 = vmatpush1.bf16.msra.mxu0 0
        %1465 = vmatprep.subr.bf16.mxu0 0
        %1466 = vmatpush1.bf16.msra.mxu0 0
        %1467 = vmatprep.subr.bf16.mxu0 0
        %1468 = vmatpush1.bf16.msra.mxu0 0
        %1469 = vmatprep.subr.bf16.mxu0 %v1376
        %1470 = vmatpush1.bf16.msra.mxu0 %v1375
        %1471 = vmatprep.subr.bf16.mxu0 %v1372
        %1472 = vmatpush1.bf16.msra.mxu0 %v1371
        %1473 = vmatprep.subr.bf16.mxu0 0
        %1474 = vmatpush2.bf16.msra.mxu0 0
        %1475 = vmatprep.subr.bf16.mxu0 0
        %1476 = vmatpush2.bf16.msra.mxu0 0
        %1477 = vmatprep.subr.bf16.mxu0 0
        %1478 = vmatpush2.bf16.msra.mxu0 0
        %1479 = vmatprep.subr.bf16.mxu0 0
        %1480 = vmatpush2.bf16.msra.mxu0 0
        %1481 = vmatprep.subr.bf16.mxu0 0
        %1482 = vmatpush2.bf16.msra.mxu0 0
        %1483 = vmatprep.subr.bf16.mxu0 0
        %1484 = vmatpush2.bf16.msra.mxu0 0
        %1485 = vmatprep.subr.bf16.mxu0 0
        %1486 = vmatpush2.bf16.msra.mxu0 0
        %1487 = vmatprep.subr.bf16.mxu0 0
        %1488 = vmatpush2.bf16.msra.mxu0 0
        %1489 = vmatprep.mubr.bf16.mxu0 0
        %1490 = vmatmul.mubr.bf16.gmra.mxu0 %v1401
        %v1491 = vpop.f32.mrf.mxu0
        %v1492 = vadd.f32 %v1380, %v1491
        %v1493 = vpop.f32.mrf.mxu0
        %v1494 = vadd.f32 %v1380, %v1493
        %v1495 = vpop.f32.mrf.mxu0
        %v1496 = vadd.f32 %v1385, %v1495
        %v1497 = vpop.f32.mrf.mxu0
        %v1498 = vadd.f32 %v1385, %v1497
        %1499 = vmatprep.mubr.bf16.mxu0 0
        %1500 = vmatmul.mubr.bf16.gmra.mxu0 %v1404
        %v1501 = vpop.f32.mrf.mxu0
        %v1502 = vadd.f32 %v1390, %v1501
        %v1503 = vpop.f32.mrf.mxu0
        %v1504 = vadd.f32 %v1390, %v1503
        %v1505 = vpop.f32.mrf.mxu0
        %v1506 = vpop.f32.mrf.mxu0
        %1507 = vdwg.mxu0
        %v1508 = vpack.c.bf16 %v1445, %v1441
        %v1509 = vpack.c.bf16 %v1447, %v1443
        %v1510 = vpack.c.bf16 %v1496, %v1492
        %v1511 = vpack.c.bf16 %v1498, %v1494
        %v1512 = vpack.c.bf16 %v1451, %v1451
        %v1513 = vpack.c.bf16 %v1453, %v1453
        %v1514 = vpack.c.bf16 %v1502, %v1502
        %v1515 = vpack.c.bf16 %v1504, %v1504
        %v1524 = vunpack.c.l.b16 %v1508
        %v1525 = vunpack.c.l.b16 %v1509
        %v1526 = vunpack.c.l.b16 %v1510
        %v1527 = vunpack.c.l.b16 %v1511
        %v1528 = vunpack.c.h.b16 %v1508
        %v1529 = vunpack.c.h.b16 %v1509
        %v1530 = vunpack.c.h.b16 %v1510
        %v1531 = vunpack.c.h.b16 %v1511
        %v1532 = vunpack.c.l.b16 %v1512
        %v1533 = vunpack.c.l.b16 %v1513
        %v1534 = vunpack.c.l.b16 %v1514
        %v1535 = vunpack.c.l.b16 %v1515
        %v1536 = vpack.c.b16 %v1525, %v1524
        %v1537 = vpack.c.b16 %v1527, %v1526
        %v1538 = vpack.c.b16 %v1529, %v1528
        %v1539 = vpack.c.b16 %v1531, %v1530
        %v1540 = vpack.c.b16 %v1533, %v1532
        %v1541 = vpack.c.b16 %v1535, %v1534
        %1548 = vst [vmem:[%s245] sm:$0xff] %v1536
        %1549 = vst [vmem:[%s245 + $0x8] sm:$0xff] %v1537
        %1550 = vst [vmem:[%s245 + $0x20] sm:$0xff] %v1538
        %1551 = vst [vmem:[%s245 + $0x28] sm:$0xff] %v1539
        %1552 = vst [vmem:[%s245 + $0x40] sm:$0x33] %v1540
        %1553 = vst [vmem:[%s245 + $0x48] sm:$0x33] %v1541
        %s1554 = scalar_lea.vmem %s250, 8
        %v1555 = vld [vmem:[%s1554] sm:$0xff]
        %v1557 = vcombine.high %v1555, %v1555
        %v1559 = vunpack.c.l.s4 1983009808
        %v1560 = vunpack.c.0.s8 %v1559
        %v1561 = vlaneseq
        %v1562 = vshrl.u32 %v1561, 7
        %v1563 = vsub.s32 %v1560, %v1562
        %v1564 = vrot.slane %v1555, %v1563
        %v1566 = vunpack.c.l.s4 1983009808
        %v1567 = vunpack.c.0.s8 %v1566
        %v1568 = vlaneseq
        %v1569 = vshrl.u32 %v1568, 7
        %v1570 = vsub.s32 %v1567, %v1569
        %v1571 = vrot.slane %v1557, %v1570
        %v1572 = vcombine.high %v1564, %v1564
        %v1573 = vcombine.high %v1571, %v1571
        %v1575 = vand.u32 %v1564, %v361
        %v1578 = vand.u32 %v1572, %v361
        %v1581 = vand.u32 %v1571, %v361
        %v1584 = vand.u32 %v1573, %v361
        %1586 = vmatprep.subr.bf16.mxu0 0
        %1587 = vmatpush1.bf16.msra.mxu0 0
        %1588 = vmatprep.subr.bf16.mxu0 0
        %1589 = vmatpush1.bf16.msra.mxu0 0
        %1590 = vmatprep.subr.bf16.mxu0 0
        %1591 = vmatpush1.bf16.msra.mxu0 0
        %1592 = vmatprep.subr.bf16.mxu0 0
        %1593 = vmatpush1.bf16.msra.mxu0 0
        %1594 = vmatprep.subr.bf16.mxu0 0
        %1595 = vmatpush1.bf16.msra.mxu0 0
        %1596 = vmatprep.subr.bf16.mxu0 0
        %1597 = vmatpush1.bf16.msra.mxu0 0
        %1598 = vmatprep.subr.bf16.mxu0 0
        %1599 = vmatpush1.bf16.msra.mxu0 0
        %1600 = vmatprep.subr.bf16.mxu0 %v1578
        %1601 = vmatpush1.bf16.msra.mxu0 %v1575
        %1602 = vmatprep.subr.bf16.mxu0 0
        %1603 = vmatpush2.bf16.msra.mxu0 0
        %1604 = vmatprep.subr.bf16.mxu0 0
        %1605 = vmatpush2.bf16.msra.mxu0 0
        %1606 = vmatprep.subr.bf16.mxu0 0
        %1607 = vmatpush2.bf16.msra.mxu0 0
        %1608 = vmatprep.subr.bf16.mxu0 0
        %1609 = vmatpush2.bf16.msra.mxu0 0
        %1610 = vmatprep.subr.bf16.mxu0 0
        %1611 = vmatpush2.bf16.msra.mxu0 0
        %1612 = vmatprep.subr.bf16.mxu0 0
        %1613 = vmatpush2.bf16.msra.mxu0 0
        %1614 = vmatprep.subr.bf16.mxu0 0
        %1615 = vmatpush2.bf16.msra.mxu0 0
        %1616 = vmatprep.subr.bf16.mxu0 0
        %1617 = vmatpush2.bf16.msra.mxu0 0
        %1618 = vmatprep.mubr.bf16.mxu0 0
        %1619 = vmatmul.mubr.bf16.gmra.mxu0 %v353
        %v1620 = vpop.f32.mrf.mxu0
        %v1621 = vadd.f32 0.0, %v1620
        %v1622 = vpop.f32.mrf.mxu0
        %v1623 = vadd.f32 0.0, %v1622
        %v1624 = vpop.f32.mrf.mxu0
        %v1625 = vadd.f32 0.0, %v1624
        %v1626 = vpop.f32.mrf.mxu0
        %v1627 = vadd.f32 0.0, %v1626
        %1628 = vmatprep.mubr.bf16.mxu0 0
        %1629 = vmatmul.mubr.bf16.gmra.mxu0 %v356
        %v1630 = vpop.f32.mrf.mxu0
        %v1631 = vadd.f32 0.0, %v1630
        %v1632 = vpop.f32.mrf.mxu0
        %v1633 = vadd.f32 0.0, %v1632
        %v1634 = vpop.f32.mrf.mxu0
        %v1635 = vadd.f32 0.0, %v1634
        %v1636 = vpop.f32.mrf.mxu0
        %v1637 = vadd.f32 0.0, %v1636
        %1638 = vdwg.mxu0
        %1639 = vmatprep.subr.bf16.mxu0 0
        %1640 = vmatpush1.bf16.msra.mxu0 0
        %1641 = vmatprep.subr.bf16.mxu0 0
        %1642 = vmatpush1.bf16.msra.mxu0 0
        %1643 = vmatprep.subr.bf16.mxu0 0
        %1644 = vmatpush1.bf16.msra.mxu0 0
        %1645 = vmatprep.subr.bf16.mxu0 0
        %1646 = vmatpush1.bf16.msra.mxu0 0
        %1647 = vmatprep.subr.bf16.mxu0 0
        %1648 = vmatpush1.bf16.msra.mxu0 0
        %1649 = vmatprep.subr.bf16.mxu0 0
        %1650 = vmatpush1.bf16.msra.mxu0 0
        %1651 = vmatprep.subr.bf16.mxu0 0
        %1652 = vmatpush1.bf16.msra.mxu0 0
        %1653 = vmatprep.subr.bf16.mxu0 %v1584
        %1654 = vmatpush1.bf16.msra.mxu0 %v1581
        %1655 = vmatprep.subr.bf16.mxu0 0
        %1656 = vmatpush2.bf16.msra.mxu0 0
        %1657 = vmatprep.subr.bf16.mxu0 0
        %1658 = vmatpush2.bf16.msra.mxu0 0
        %1659 = vmatprep.subr.bf16.mxu0 0
        %1660 = vmatpush2.bf16.msra.mxu0 0
        %1661 = vmatprep.subr.bf16.mxu0 0
        %1662 = vmatpush2.bf16.msra.mxu0 0
        %1663 = vmatprep.subr.bf16.mxu0 0
        %1664 = vmatpush2.bf16.msra.mxu0 0
        %1665 = vmatprep.subr.bf16.mxu0 0
        %1666 = vmatpush2.bf16.msra.mxu0 0
        %1667 = vmatprep.subr.bf16.mxu0 0
        %1668 = vmatpush2.bf16.msra.mxu0 0
        %1669 = vmatprep.subr.bf16.mxu0 0
        %1670 = vmatpush2.bf16.msra.mxu0 0
        %1671 = vmatprep.mubr.bf16.mxu0 0
        %1672 = vmatmul.mubr.bf16.gmra.mxu0 %v353
        %v1673 = vpop.f32.mrf.mxu0
        %v1674 = vadd.f32 0.0, %v1673
        %v1675 = vpop.f32.mrf.mxu0
        %v1676 = vadd.f32 0.0, %v1675
        %v1677 = vpop.f32.mrf.mxu0
        %v1678 = vadd.f32 0.0, %v1677
        %v1679 = vpop.f32.mrf.mxu0
        %v1680 = vadd.f32 0.0, %v1679
        %1681 = vmatprep.mubr.bf16.mxu0 0
        %1682 = vmatmul.mubr.bf16.gmra.mxu0 %v356
        %v1683 = vpop.f32.mrf.mxu0
        %v1684 = vadd.f32 0.0, %v1683
        %v1685 = vpop.f32.mrf.mxu0
        %v1686 = vadd.f32 0.0, %v1685
        %v1687 = vpop.f32.mrf.mxu0
        %v1688 = vadd.f32 0.0, %v1687
        %v1689 = vpop.f32.mrf.mxu0
        %v1690 = vadd.f32 0.0, %v1689
        %1691 = vdwg.mxu0
        %v1692 = vmul.f32 %v1621, %v483
        %v1693 = vmul.f32 %v1623, %v483
        %v1694 = vmul.f32 %v1674, %v483
        %v1695 = vmul.f32 %v1676, %v483
        %v1696 = vmul.f32 %v1625, %v488
        %v1697 = vmul.f32 %v1627, %v488
        %v1698 = vmul.f32 %v1678, %v488
        %v1699 = vmul.f32 %v1680, %v488
        %v1700 = vmul.f32 %v1631, %v493
        %v1701 = vmul.f32 %v1633, %v493
        %v1702 = vmul.f32 %v1684, %v493
        %v1703 = vmul.f32 %v1686, %v493
        %v1704 = vmul.f32 %v1635, %v498
        %v1705 = vmul.f32 %v1637, %v498
        %v1706 = vmul.f32 %v1688, %v498
        %v1707 = vmul.f32 %v1690, %v498
        %v1708 = vadd.f32 %v1692, %v519
        %v1709 = vadd.f32 %v1693, %v519
        %v1710 = vadd.f32 %v1694, %v519
        %v1711 = vadd.f32 %v1695, %v519
        %v1712 = vadd.f32 %v1696, %v524
        %v1713 = vadd.f32 %v1697, %v524
        %v1714 = vadd.f32 %v1698, %v524
        %v1715 = vadd.f32 %v1699, %v524
        %v1716 = vadd.f32 %v1700, %v529
        %v1717 = vadd.f32 %v1701, %v529
        %v1718 = vadd.f32 %v1702, %v529
        %v1719 = vadd.f32 %v1703, %v529
        %v1720 = vadd.f32 %v1704, %v534
        %v1721 = vadd.f32 %v1705, %v534
        %v1722 = vadd.f32 %v1706, %v534
        %v1723 = vadd.f32 %v1707, %v534
        %v1724 = vmax.f32 %v1708, 0.0
        %v1725 = vmax.f32 %v1709, 0.0
        %v1726 = vmax.f32 %v1710, 0.0
        %v1727 = vmax.f32 %v1711, 0.0
        %v1728 = vmax.f32 %v1712, 0.0
        %v1729 = vmax.f32 %v1713, 0.0
        %v1730 = vmax.f32 %v1714, 0.0
        %v1731 = vmax.f32 %v1715, 0.0
        %v1732 = vmax.f32 %v1716, 0.0
        %v1733 = vmax.f32 %v1717, 0.0
        %v1734 = vmax.f32 %v1718, 0.0
        %v1735 = vmax.f32 %v1719, 0.0
        %v1736 = vmax.f32 %v1720, 0.0
        %v1737 = vmax.f32 %v1721, 0.0
        %v1738 = vmax.f32 %v1722, 0.0
        %v1739 = vmax.f32 %v1723, 0.0
        %v1740 = vpack.c.bf16 %v1728, %v1724
        %v1741 = vpack.c.bf16 %v1729, %v1725
        %v1742 = vpack.c.bf16 %v1730, %v1726
        %v1743 = vpack.c.bf16 %v1731, %v1727
        %v1744 = vpack.c.bf16 %v1736, %v1732
        %v1745 = vpack.c.bf16 %v1737, %v1733
        %v1746 = vpack.c.bf16 %v1738, %v1734
        %v1747 = vpack.c.bf16 %v1739, %v1735
        %1748 = vmatprep.subr.bf16.mxu0 0
        %1749 = vmatpush1.bf16.msra.mxu0 0
        %1750 = vmatprep.subr.bf16.mxu0 0
        %1751 = vmatpush1.bf16.msra.mxu0 0
        %1752 = vmatprep.subr.bf16.mxu0 0
        %1753 = vmatpush1.bf16.msra.mxu0 0
        %1754 = vmatprep.subr.bf16.mxu0 0
        %1755 = vmatpush1.bf16.msra.mxu0 0
        %1756 = vmatprep.subr.bf16.mxu0 0
        %1757 = vmatpush1.bf16.msra.mxu0 0
        %1758 = vmatprep.subr.bf16.mxu0 0
        %1759 = vmatpush1.bf16.msra.mxu0 0
        %1760 = vmatprep.subr.bf16.mxu0 %v1745
        %1761 = vmatpush1.bf16.msra.mxu0 %v1744
        %1762 = vmatprep.subr.bf16.mxu0 %v1741
        %1763 = vmatpush1.bf16.msra.mxu0 %v1740
        %1764 = vmatprep.subr.bf16.mxu0 0
        %1765 = vmatpush2.bf16.msra.mxu0 0
        %1766 = vmatprep.subr.bf16.mxu0 0
        %1767 = vmatpush2.bf16.msra.mxu0 0
        %1768 = vmatprep.subr.bf16.mxu0 0
        %1769 = vmatpush2.bf16.msra.mxu0 0
        %1770 = vmatprep.subr.bf16.mxu0 0
        %1771 = vmatpush2.bf16.msra.mxu0 0
        %1772 = vmatprep.subr.bf16.mxu0 0
        %1773 = vmatpush2.bf16.msra.mxu0 0
        %1774 = vmatprep.subr.bf16.mxu0 0
        %1775 = vmatpush2.bf16.msra.mxu0 0
        %1776 = vmatprep.subr.bf16.mxu0 0
        %1777 = vmatpush2.bf16.msra.mxu0 0
        %1778 = vmatprep.subr.bf16.mxu0 0
        %1779 = vmatpush2.bf16.msra.mxu0 0
        %1780 = vmatprep.mubr.bf16.mxu0 0
        %1781 = vmatmul.mubr.bf16.gmra.mxu0 %v608
        %v1782 = vpop.f32.mrf.mxu0
        %v1783 = vadd.f32 %v579, %v1782
        %v1784 = vpop.f32.mrf.mxu0
        %v1785 = vadd.f32 %v579, %v1784
        %v1786 = vpop.f32.mrf.mxu0
        %v1787 = vadd.f32 %v584, %v1786
        %v1788 = vpop.f32.mrf.mxu0
        %v1789 = vadd.f32 %v584, %v1788
        %1790 = vmatprep.mubr.bf16.mxu0 0
        %1791 = vmatmul.mubr.bf16.gmra.mxu0 %v611
        %v1792 = vpop.f32.mrf.mxu0
        %v1793 = vadd.f32 %v589, %v1792
        %v1794 = vpop.f32.mrf.mxu0
        %v1795 = vadd.f32 %v589, %v1794
        %v1796 = vpop.f32.mrf.mxu0
        %v1797 = vadd.f32 %v594, %v1796
        %v1798 = vpop.f32.mrf.mxu0
        %v1799 = vadd.f32 %v594, %v1798
        %1800 = vdwg.mxu0
        %1801 = vmatprep.subr.bf16.mxu0 0
        %1802 = vmatpush1.bf16.msra.mxu0 0
        %1803 = vmatprep.subr.bf16.mxu0 0
        %1804 = vmatpush1.bf16.msra.mxu0 0
        %1805 = vmatprep.subr.bf16.mxu0 0
        %1806 = vmatpush1.bf16.msra.mxu0 0
        %1807 = vmatprep.subr.bf16.mxu0 0
        %1808 = vmatpush1.bf16.msra.mxu0 0
        %1809 = vmatprep.subr.bf16.mxu0 0
        %1810 = vmatpush1.bf16.msra.mxu0 0
        %1811 = vmatprep.subr.bf16.mxu0 0
        %1812 = vmatpush1.bf16.msra.mxu0 0
        %1813 = vmatprep.subr.bf16.mxu0 %v1747
        %1814 = vmatpush1.bf16.msra.mxu0 %v1746
        %1815 = vmatprep.subr.bf16.mxu0 %v1743
        %1816 = vmatpush1.bf16.msra.mxu0 %v1742
        %1817 = vmatprep.subr.bf16.mxu0 0
        %1818 = vmatpush2.bf16.msra.mxu0 0
        %1819 = vmatprep.subr.bf16.mxu0 0
        %1820 = vmatpush2.bf16.msra.mxu0 0
        %1821 = vmatprep.subr.bf16.mxu0 0
        %1822 = vmatpush2.bf16.msra.mxu0 0
        %1823 = vmatprep.subr.bf16.mxu0 0
        %1824 = vmatpush2.bf16.msra.mxu0 0
        %1825 = vmatprep.subr.bf16.mxu0 0
        %1826 = vmatpush2.bf16.msra.mxu0 0
        %1827 = vmatprep.subr.bf16.mxu0 0
        %1828 = vmatpush2.bf16.msra.mxu0 0
        %1829 = vmatprep.subr.bf16.mxu0 0
        %1830 = vmatpush2.bf16.msra.mxu0 0
        %1831 = vmatprep.subr.bf16.mxu0 0
        %1832 = vmatpush2.bf16.msra.mxu0 0
        %1833 = vmatprep.mubr.bf16.mxu0 0
        %1834 = vmatmul.mubr.bf16.gmra.mxu0 %v608
        %v1835 = vpop.f32.mrf.mxu0
        %v1836 = vadd.f32 %v579, %v1835
        %v1837 = vpop.f32.mrf.mxu0
        %v1838 = vadd.f32 %v579, %v1837
        %v1839 = vpop.f32.mrf.mxu0
        %v1840 = vadd.f32 %v584, %v1839
        %v1841 = vpop.f32.mrf.mxu0
        %v1842 = vadd.f32 %v584, %v1841
        %1843 = vmatprep.mubr.bf16.mxu0 0
        %1844 = vmatmul.mubr.bf16.gmra.mxu0 %v611
        %v1845 = vpop.f32.mrf.mxu0
        %v1846 = vadd.f32 %v589, %v1845
        %v1847 = vpop.f32.mrf.mxu0
        %v1848 = vadd.f32 %v589, %v1847
        %v1849 = vpop.f32.mrf.mxu0
        %v1850 = vadd.f32 %v594, %v1849
        %v1851 = vpop.f32.mrf.mxu0
        %v1852 = vadd.f32 %v594, %v1851
        %1853 = vdwg.mxu0
        %v1854 = vmax.f32 %v1783, 0.0
        %v1855 = vmax.f32 %v1785, 0.0
        %v1856 = vmax.f32 %v1836, 0.0
        %v1857 = vmax.f32 %v1838, 0.0
        %v1858 = vmax.f32 %v1787, 0.0
        %v1859 = vmax.f32 %v1789, 0.0
        %v1860 = vmax.f32 %v1840, 0.0
        %v1861 = vmax.f32 %v1842, 0.0
        %v1862 = vmax.f32 %v1793, 0.0
        %v1863 = vmax.f32 %v1795, 0.0
        %v1864 = vmax.f32 %v1846, 0.0
        %v1865 = vmax.f32 %v1848, 0.0
        %v1866 = vmax.f32 %v1797, 0.0
        %v1867 = vmax.f32 %v1799, 0.0
        %v1868 = vmax.f32 %v1850, 0.0
        %v1869 = vmax.f32 %v1852, 0.0
        %v1870 = vpack.c.bf16 %v1858, %v1854
        %v1871 = vpack.c.bf16 %v1859, %v1855
        %v1872 = vpack.c.bf16 %v1860, %v1856
        %v1873 = vpack.c.bf16 %v1861, %v1857
        %v1874 = vpack.c.bf16 %v1866, %v1862
        %v1875 = vpack.c.bf16 %v1867, %v1863
        %v1876 = vpack.c.bf16 %v1868, %v1864
        %v1877 = vpack.c.bf16 %v1869, %v1865
        %1878 = vmatprep.subr.bf16.mxu0 0
        %1879 = vmatpush1.bf16.msra.mxu0 0
        %1880 = vmatprep.subr.bf16.mxu0 0
        %1881 = vmatpush1.bf16.msra.mxu0 0
        %1882 = vmatprep.subr.bf16.mxu0 0
        %1883 = vmatpush1.bf16.msra.mxu0 0
        %1884 = vmatprep.subr.bf16.mxu0 0
        %1885 = vmatpush1.bf16.msra.mxu0 0
        %1886 = vmatprep.subr.bf16.mxu0 0
        %1887 = vmatpush1.bf16.msra.mxu0 0
        %1888 = vmatprep.subr.bf16.mxu0 0
        %1889 = vmatpush1.bf16.msra.mxu0 0
        %1890 = vmatprep.subr.bf16.mxu0 %v1875
        %1891 = vmatpush1.bf16.msra.mxu0 %v1874
        %1892 = vmatprep.subr.bf16.mxu0 %v1871
        %1893 = vmatpush1.bf16.msra.mxu0 %v1870
        %1894 = vmatprep.subr.bf16.mxu0 0
        %1895 = vmatpush2.bf16.msra.mxu0 0
        %1896 = vmatprep.subr.bf16.mxu0 0
        %1897 = vmatpush2.bf16.msra.mxu0 0
        %1898 = vmatprep.subr.bf16.mxu0 0
        %1899 = vmatpush2.bf16.msra.mxu0 0
        %1900 = vmatprep.subr.bf16.mxu0 0
        %1901 = vmatpush2.bf16.msra.mxu0 0
        %1902 = vmatprep.subr.bf16.mxu0 0
        %1903 = vmatpush2.bf16.msra.mxu0 0
        %1904 = vmatprep.subr.bf16.mxu0 0
        %1905 = vmatpush2.bf16.msra.mxu0 0
        %1906 = vmatprep.subr.bf16.mxu0 0
        %1907 = vmatpush2.bf16.msra.mxu0 0
        %1908 = vmatprep.subr.bf16.mxu0 0
        %1909 = vmatpush2.bf16.msra.mxu0 0
        %1910 = vmatprep.mubr.bf16.mxu0 0
        %1911 = vmatmul.mubr.bf16.gmra.mxu0 %v754
        %v1912 = vpop.f32.mrf.mxu0
        %v1913 = vadd.f32 0.0, %v1912
        %v1914 = vpop.f32.mrf.mxu0
        %v1915 = vadd.f32 0.0, %v1914
        %v1916 = vpop.f32.mrf.mxu0
        %v1917 = vadd.f32 0.0, %v1916
        %v1918 = vpop.f32.mrf.mxu0
        %v1919 = vadd.f32 0.0, %v1918
        %1920 = vmatprep.mubr.bf16.mxu0 0
        %1921 = vmatmul.mubr.bf16.gmra.mxu0 %v757
        %v1922 = vpop.f32.mrf.mxu0
        %v1923 = vadd.f32 0.0, %v1922
        %v1924 = vpop.f32.mrf.mxu0
        %v1925 = vadd.f32 0.0, %v1924
        %v1926 = vpop.f32.mrf.mxu0
        %v1927 = vadd.f32 0.0, %v1926
        %v1928 = vpop.f32.mrf.mxu0
        %v1929 = vadd.f32 0.0, %v1928
        %1930 = vdwg.mxu0
        %1931 = vmatprep.subr.bf16.mxu0 0
        %1932 = vmatpush1.bf16.msra.mxu0 0
        %1933 = vmatprep.subr.bf16.mxu0 0
        %1934 = vmatpush1.bf16.msra.mxu0 0
        %1935 = vmatprep.subr.bf16.mxu0 0
        %1936 = vmatpush1.bf16.msra.mxu0 0
        %1937 = vmatprep.subr.bf16.mxu0 0
        %1938 = vmatpush1.bf16.msra.mxu0 0
        %1939 = vmatprep.subr.bf16.mxu0 0
        %1940 = vmatpush1.bf16.msra.mxu0 0
        %1941 = vmatprep.subr.bf16.mxu0 0
        %1942 = vmatpush1.bf16.msra.mxu0 0
        %1943 = vmatprep.subr.bf16.mxu0 %v1877
        %1944 = vmatpush1.bf16.msra.mxu0 %v1876
        %1945 = vmatprep.subr.bf16.mxu0 %v1873
        %1946 = vmatpush1.bf16.msra.mxu0 %v1872
        %1947 = vmatprep.subr.bf16.mxu0 0
        %1948 = vmatpush2.bf16.msra.mxu0 0
        %1949 = vmatprep.subr.bf16.mxu0 0
        %1950 = vmatpush2.bf16.msra.mxu0 0
        %1951 = vmatprep.subr.bf16.mxu0 0
        %1952 = vmatpush2.bf16.msra.mxu0 0
        %1953 = vmatprep.subr.bf16.mxu0 0
        %1954 = vmatpush2.bf16.msra.mxu0 0
        %1955 = vmatprep.subr.bf16.mxu0 0
        %1956 = vmatpush2.bf16.msra.mxu0 0
        %1957 = vmatprep.subr.bf16.mxu0 0
        %1958 = vmatpush2.bf16.msra.mxu0 0
        %1959 = vmatprep.subr.bf16.mxu0 0
        %1960 = vmatpush2.bf16.msra.mxu0 0
        %1961 = vmatprep.subr.bf16.mxu0 0
        %1962 = vmatpush2.bf16.msra.mxu0 0
        %1963 = vmatprep.mubr.bf16.mxu0 0
        %1964 = vmatmul.mubr.bf16.gmra.mxu0 %v754
        %v1965 = vpop.f32.mrf.mxu0
        %v1966 = vadd.f32 0.0, %v1965
        %v1967 = vpop.f32.mrf.mxu0
        %v1968 = vadd.f32 0.0, %v1967
        %v1969 = vpop.f32.mrf.mxu0
        %v1970 = vadd.f32 0.0, %v1969
        %v1971 = vpop.f32.mrf.mxu0
        %v1972 = vadd.f32 0.0, %v1971
        %1973 = vmatprep.mubr.bf16.mxu0 0
        %1974 = vmatmul.mubr.bf16.gmra.mxu0 %v757
        %v1975 = vpop.f32.mrf.mxu0
        %v1976 = vadd.f32 0.0, %v1975
        %v1977 = vpop.f32.mrf.mxu0
        %v1978 = vadd.f32 0.0, %v1977
        %v1979 = vpop.f32.mrf.mxu0
        %v1980 = vadd.f32 0.0, %v1979
        %v1981 = vpop.f32.mrf.mxu0
        %v1982 = vadd.f32 0.0, %v1981
        %1983 = vdwg.mxu0
        %v1984 = vadd.f32 %v1621, %v1913
        %v1985 = vadd.f32 %v1623, %v1915
        %v1986 = vadd.f32 %v1674, %v1966
        %v1987 = vadd.f32 %v1676, %v1968
        %v1988 = vadd.f32 %v1625, %v1917
        %v1989 = vadd.f32 %v1627, %v1919
        %v1990 = vadd.f32 %v1678, %v1970
        %v1991 = vadd.f32 %v1680, %v1972
        %v1992 = vadd.f32 %v1631, %v1923
        %v1993 = vadd.f32 %v1633, %v1925
        %v1994 = vadd.f32 %v1684, %v1976
        %v1995 = vadd.f32 %v1686, %v1978
        %v1996 = vadd.f32 %v1635, %v1927
        %v1997 = vadd.f32 %v1637, %v1929
        %v1998 = vadd.f32 %v1688, %v1980
        %v1999 = vadd.f32 %v1690, %v1982
        %v2000 = vmul.f32 %v1984, %v884
        %v2001 = vmul.f32 %v1985, %v884
        %v2002 = vmul.f32 %v1986, %v884
        %v2003 = vmul.f32 %v1987, %v884
        %v2004 = vmul.f32 %v1988, %v889
        %v2005 = vmul.f32 %v1989, %v889
        %v2006 = vmul.f32 %v1990, %v889
        %v2007 = vmul.f32 %v1991, %v889
        %v2008 = vmul.f32 %v1992, %v894
        %v2009 = vmul.f32 %v1993, %v894
        %v2010 = vmul.f32 %v1994, %v894
        %v2011 = vmul.f32 %v1995, %v894
        %v2012 = vmul.f32 %v1996, %v899
        %v2013 = vmul.f32 %v1997, %v899
        %v2014 = vmul.f32 %v1998, %v899
        %v2015 = vmul.f32 %v1999, %v899
        %v2016 = vadd.f32 %v2000, %v920
        %v2017 = vadd.f32 %v2001, %v920
        %v2018 = vadd.f32 %v2002, %v920
        %v2019 = vadd.f32 %v2003, %v920
        %v2020 = vadd.f32 %v2004, %v925
        %v2021 = vadd.f32 %v2005, %v925
        %v2022 = vadd.f32 %v2006, %v925
        %v2023 = vadd.f32 %v2007, %v925
        %v2024 = vadd.f32 %v2008, %v930
        %v2025 = vadd.f32 %v2009, %v930
        %v2026 = vadd.f32 %v2010, %v930
        %v2027 = vadd.f32 %v2011, %v930
        %v2028 = vadd.f32 %v2012, %v935
        %v2029 = vadd.f32 %v2013, %v935
        %v2030 = vadd.f32 %v2014, %v935
        %v2031 = vadd.f32 %v2015, %v935
        %v2032 = vmax.f32 %v2016, 0.0
        %v2033 = vmax.f32 %v2017, 0.0
        %v2034 = vmax.f32 %v2018, 0.0
        %v2035 = vmax.f32 %v2019, 0.0
        %v2036 = vmax.f32 %v2020, 0.0
        %v2037 = vmax.f32 %v2021, 0.0
        %v2038 = vmax.f32 %v2022, 0.0
        %v2039 = vmax.f32 %v2023, 0.0
        %v2040 = vmax.f32 %v2024, 0.0
        %v2041 = vmax.f32 %v2025, 0.0
        %v2042 = vmax.f32 %v2026, 0.0
        %v2043 = vmax.f32 %v2027, 0.0
        %v2044 = vmax.f32 %v2028, 0.0
        %v2045 = vmax.f32 %v2029, 0.0
        %v2046 = vmax.f32 %v2030, 0.0
        %v2047 = vmax.f32 %v2031, 0.0
        %v2048 = vpack.c.bf16 %v2036, %v2032
        %v2049 = vpack.c.bf16 %v2037, %v2033
        %v2050 = vpack.c.bf16 %v2038, %v2034
        %v2051 = vpack.c.bf16 %v2039, %v2035
        %v2052 = vpack.c.bf16 %v2044, %v2040
        %v2053 = vpack.c.bf16 %v2045, %v2041
        %v2054 = vpack.c.bf16 %v2046, %v2042
        %v2055 = vpack.c.bf16 %v2047, %v2043
        %2056 = vmatprep.subr.bf16.mxu0 0
        %2057 = vmatpush1.bf16.msra.mxu0 0
        %2058 = vmatprep.subr.bf16.mxu0 0
        %2059 = vmatpush1.bf16.msra.mxu0 0
        %2060 = vmatprep.subr.bf16.mxu0 0
        %2061 = vmatpush1.bf16.msra.mxu0 0
        %2062 = vmatprep.subr.bf16.mxu0 0
        %2063 = vmatpush1.bf16.msra.mxu0 0
        %2064 = vmatprep.subr.bf16.mxu0 0
        %2065 = vmatpush1.bf16.msra.mxu0 0
        %2066 = vmatprep.subr.bf16.mxu0 0
        %2067 = vmatpush1.bf16.msra.mxu0 0
        %2068 = vmatprep.subr.bf16.mxu0 %v2053
        %2069 = vmatpush1.bf16.msra.mxu0 %v2052
        %2070 = vmatprep.subr.bf16.mxu0 %v2049
        %2071 = vmatpush1.bf16.msra.mxu0 %v2048
        %2072 = vmatprep.subr.bf16.mxu0 0
        %2073 = vmatpush2.bf16.msra.mxu0 0
        %2074 = vmatprep.subr.bf16.mxu0 0
        %2075 = vmatpush2.bf16.msra.mxu0 0
        %2076 = vmatprep.subr.bf16.mxu0 0
        %2077 = vmatpush2.bf16.msra.mxu0 0
        %2078 = vmatprep.subr.bf16.mxu0 0
        %2079 = vmatpush2.bf16.msra.mxu0 0
        %2080 = vmatprep.subr.bf16.mxu0 0
        %2081 = vmatpush2.bf16.msra.mxu0 0
        %2082 = vmatprep.subr.bf16.mxu0 0
        %2083 = vmatpush2.bf16.msra.mxu0 0
        %2084 = vmatprep.subr.bf16.mxu0 0
        %2085 = vmatpush2.bf16.msra.mxu0 0
        %2086 = vmatprep.subr.bf16.mxu0 0
        %2087 = vmatpush2.bf16.msra.mxu0 0
        %2088 = vmatprep.mubr.bf16.mxu0 0
        %2089 = vmatmul.mubr.bf16.gmra.mxu0 %v1008
        %v2090 = vpop.f32.mrf.mxu0
        %v2091 = vadd.f32 %v980, %v2090
        %v2092 = vpop.f32.mrf.mxu0
        %v2093 = vadd.f32 %v980, %v2092
        %v2094 = vpop.f32.mrf.mxu0
        %v2095 = vadd.f32 %v985, %v2094
        %v2096 = vpop.f32.mrf.mxu0
        %v2097 = vadd.f32 %v985, %v2096
        %2098 = vmatprep.mubr.bf16.mxu0 0
        %2099 = vmatmul.mubr.bf16.gmra.mxu0 %v1011
        %v2100 = vpop.f32.mrf.mxu0
        %v2101 = vadd.f32 %v990, %v2100
        %v2102 = vpop.f32.mrf.mxu0
        %v2103 = vadd.f32 %v990, %v2102
        %v2104 = vpop.f32.mrf.mxu0
        %v2105 = vadd.f32 %v995, %v2104
        %v2106 = vpop.f32.mrf.mxu0
        %v2107 = vadd.f32 %v995, %v2106
        %2108 = vdwg.mxu0
        %2109 = vmatprep.subr.bf16.mxu0 0
        %2110 = vmatpush1.bf16.msra.mxu0 0
        %2111 = vmatprep.subr.bf16.mxu0 0
        %2112 = vmatpush1.bf16.msra.mxu0 0
        %2113 = vmatprep.subr.bf16.mxu0 0
        %2114 = vmatpush1.bf16.msra.mxu0 0
        %2115 = vmatprep.subr.bf16.mxu0 0
        %2116 = vmatpush1.bf16.msra.mxu0 0
        %2117 = vmatprep.subr.bf16.mxu0 0
        %2118 = vmatpush1.bf16.msra.mxu0 0
        %2119 = vmatprep.subr.bf16.mxu0 0
        %2120 = vmatpush1.bf16.msra.mxu0 0
        %2121 = vmatprep.subr.bf16.mxu0 %v2055
        %2122 = vmatpush1.bf16.msra.mxu0 %v2054
        %2123 = vmatprep.subr.bf16.mxu0 %v2051
        %2124 = vmatpush1.bf16.msra.mxu0 %v2050
        %2125 = vmatprep.subr.bf16.mxu0 0
        %2126 = vmatpush2.bf16.msra.mxu0 0
        %2127 = vmatprep.subr.bf16.mxu0 0
        %2128 = vmatpush2.bf16.msra.mxu0 0
        %2129 = vmatprep.subr.bf16.mxu0 0
        %2130 = vmatpush2.bf16.msra.mxu0 0
        %2131 = vmatprep.subr.bf16.mxu0 0
        %2132 = vmatpush2.bf16.msra.mxu0 0
        %2133 = vmatprep.subr.bf16.mxu0 0
        %2134 = vmatpush2.bf16.msra.mxu0 0
        %2135 = vmatprep.subr.bf16.mxu0 0
        %2136 = vmatpush2.bf16.msra.mxu0 0
        %2137 = vmatprep.subr.bf16.mxu0 0
        %2138 = vmatpush2.bf16.msra.mxu0 0
        %2139 = vmatprep.subr.bf16.mxu0 0
        %2140 = vmatpush2.bf16.msra.mxu0 0
        %2141 = vmatprep.mubr.bf16.mxu0 0
        %2142 = vmatmul.mubr.bf16.gmra.mxu0 %v1008
        %v2143 = vpop.f32.mrf.mxu0
        %v2144 = vadd.f32 %v980, %v2143
        %v2145 = vpop.f32.mrf.mxu0
        %v2146 = vadd.f32 %v980, %v2145
        %v2147 = vpop.f32.mrf.mxu0
        %v2148 = vadd.f32 %v985, %v2147
        %v2149 = vpop.f32.mrf.mxu0
        %v2150 = vadd.f32 %v985, %v2149
        %2151 = vmatprep.mubr.bf16.mxu0 0
        %2152 = vmatmul.mubr.bf16.gmra.mxu0 %v1011
        %v2153 = vpop.f32.mrf.mxu0
        %v2154 = vadd.f32 %v990, %v2153
        %v2155 = vpop.f32.mrf.mxu0
        %v2156 = vadd.f32 %v990, %v2155
        %v2157 = vpop.f32.mrf.mxu0
        %v2158 = vadd.f32 %v995, %v2157
        %v2159 = vpop.f32.mrf.mxu0
        %v2160 = vadd.f32 %v995, %v2159
        %2161 = vdwg.mxu0
        %v2162 = vmax.f32 %v2091, 0.0
        %v2163 = vmax.f32 %v2093, 0.0
        %v2164 = vmax.f32 %v2144, 0.0
        %v2165 = vmax.f32 %v2146, 0.0
        %v2166 = vmax.f32 %v2095, 0.0
        %v2167 = vmax.f32 %v2097, 0.0
        %v2168 = vmax.f32 %v2148, 0.0
        %v2169 = vmax.f32 %v2150, 0.0
        %v2170 = vmax.f32 %v2101, 0.0
        %v2171 = vmax.f32 %v2103, 0.0
        %v2172 = vmax.f32 %v2154, 0.0
        %v2173 = vmax.f32 %v2156, 0.0
        %v2174 = vmax.f32 %v2105, 0.0
        %v2175 = vmax.f32 %v2107, 0.0
        %v2176 = vmax.f32 %v2158, 0.0
        %v2177 = vmax.f32 %v2160, 0.0
        %v2178 = vpack.c.bf16 %v2166, %v2162
        %v2179 = vpack.c.bf16 %v2167, %v2163
        %v2180 = vpack.c.bf16 %v2168, %v2164
        %v2181 = vpack.c.bf16 %v2169, %v2165
        %v2182 = vpack.c.bf16 %v2174, %v2170
        %v2183 = vpack.c.bf16 %v2175, %v2171
        %v2184 = vpack.c.bf16 %v2176, %v2172
        %v2185 = vpack.c.bf16 %v2177, %v2173
        %2186 = vmatprep.subr.bf16.mxu0 0
        %2187 = vmatpush1.bf16.msra.mxu0 0
        %2188 = vmatprep.subr.bf16.mxu0 0
        %2189 = vmatpush1.bf16.msra.mxu0 0
        %2190 = vmatprep.subr.bf16.mxu0 0
        %2191 = vmatpush1.bf16.msra.mxu0 0
        %2192 = vmatprep.subr.bf16.mxu0 0
        %2193 = vmatpush1.bf16.msra.mxu0 0
        %2194 = vmatprep.subr.bf16.mxu0 0
        %2195 = vmatpush1.bf16.msra.mxu0 0
        %2196 = vmatprep.subr.bf16.mxu0 0
        %2197 = vmatpush1.bf16.msra.mxu0 0
        %2198 = vmatprep.subr.bf16.mxu0 %v2183
        %2199 = vmatpush1.bf16.msra.mxu0 %v2182
        %2200 = vmatprep.subr.bf16.mxu0 %v2179
        %2201 = vmatpush1.bf16.msra.mxu0 %v2178
        %2202 = vmatprep.subr.bf16.mxu0 0
        %2203 = vmatpush2.bf16.msra.mxu0 0
        %2204 = vmatprep.subr.bf16.mxu0 0
        %2205 = vmatpush2.bf16.msra.mxu0 0
        %2206 = vmatprep.subr.bf16.mxu0 0
        %2207 = vmatpush2.bf16.msra.mxu0 0
        %2208 = vmatprep.subr.bf16.mxu0 0
        %2209 = vmatpush2.bf16.msra.mxu0 0
        %2210 = vmatprep.subr.bf16.mxu0 0
        %2211 = vmatpush2.bf16.msra.mxu0 0
        %2212 = vmatprep.subr.bf16.mxu0 0
        %2213 = vmatpush2.bf16.msra.mxu0 0
        %2214 = vmatprep.subr.bf16.mxu0 0
        %2215 = vmatpush2.bf16.msra.mxu0 0
        %2216 = vmatprep.subr.bf16.mxu0 0
        %2217 = vmatpush2.bf16.msra.mxu0 0
        %2218 = vmatprep.mubr.bf16.mxu0 0
        %2219 = vmatmul.mubr.bf16.gmra.mxu0 %v1154
        %v2220 = vpop.f32.mrf.mxu0
        %v2221 = vadd.f32 0.0, %v2220
        %v2222 = vpop.f32.mrf.mxu0
        %v2223 = vadd.f32 0.0, %v2222
        %v2224 = vpop.f32.mrf.mxu0
        %v2225 = vadd.f32 0.0, %v2224
        %v2226 = vpop.f32.mrf.mxu0
        %v2227 = vadd.f32 0.0, %v2226
        %2228 = vmatprep.mubr.bf16.mxu0 0
        %2229 = vmatmul.mubr.bf16.gmra.mxu0 %v1157
        %v2230 = vpop.f32.mrf.mxu0
        %v2231 = vadd.f32 0.0, %v2230
        %v2232 = vpop.f32.mrf.mxu0
        %v2233 = vadd.f32 0.0, %v2232
        %v2234 = vpop.f32.mrf.mxu0
        %v2235 = vadd.f32 0.0, %v2234
        %v2236 = vpop.f32.mrf.mxu0
        %v2237 = vadd.f32 0.0, %v2236
        %2238 = vdwg.mxu0
        %2239 = vmatprep.subr.bf16.mxu0 0
        %2240 = vmatpush1.bf16.msra.mxu0 0
        %2241 = vmatprep.subr.bf16.mxu0 0
        %2242 = vmatpush1.bf16.msra.mxu0 0
        %2243 = vmatprep.subr.bf16.mxu0 0
        %2244 = vmatpush1.bf16.msra.mxu0 0
        %2245 = vmatprep.subr.bf16.mxu0 0
        %2246 = vmatpush1.bf16.msra.mxu0 0
        %2247 = vmatprep.subr.bf16.mxu0 0
        %2248 = vmatpush1.bf16.msra.mxu0 0
        %2249 = vmatprep.subr.bf16.mxu0 0
        %2250 = vmatpush1.bf16.msra.mxu0 0
        %2251 = vmatprep.subr.bf16.mxu0 %v2185
        %2252 = vmatpush1.bf16.msra.mxu0 %v2184
        %2253 = vmatprep.subr.bf16.mxu0 %v2181
        %2254 = vmatpush1.bf16.msra.mxu0 %v2180
        %2255 = vmatprep.subr.bf16.mxu0 0
        %2256 = vmatpush2.bf16.msra.mxu0 0
        %2257 = vmatprep.subr.bf16.mxu0 0
        %2258 = vmatpush2.bf16.msra.mxu0 0
        %2259 = vmatprep.subr.bf16.mxu0 0
        %2260 = vmatpush2.bf16.msra.mxu0 0
        %2261 = vmatprep.subr.bf16.mxu0 0
        %2262 = vmatpush2.bf16.msra.mxu0 0
        %2263 = vmatprep.subr.bf16.mxu0 0
        %2264 = vmatpush2.bf16.msra.mxu0 0
        %2265 = vmatprep.subr.bf16.mxu0 0
        %2266 = vmatpush2.bf16.msra.mxu0 0
        %2267 = vmatprep.subr.bf16.mxu0 0
        %2268 = vmatpush2.bf16.msra.mxu0 0
        %2269 = vmatprep.subr.bf16.mxu0 0
        %2270 = vmatpush2.bf16.msra.mxu0 0
        %2271 = vmatprep.mubr.bf16.mxu0 0
        %2272 = vmatmul.mubr.bf16.gmra.mxu0 %v1154
        %v2273 = vpop.f32.mrf.mxu0
        %v2274 = vadd.f32 0.0, %v2273
        %v2275 = vpop.f32.mrf.mxu0
        %v2276 = vadd.f32 0.0, %v2275
        %v2277 = vpop.f32.mrf.mxu0
        %v2278 = vadd.f32 0.0, %v2277
        %v2279 = vpop.f32.mrf.mxu0
        %v2280 = vadd.f32 0.0, %v2279
        %2281 = vmatprep.mubr.bf16.mxu0 0
        %2282 = vmatmul.mubr.bf16.gmra.mxu0 %v1157
        %v2283 = vpop.f32.mrf.mxu0
        %v2284 = vadd.f32 0.0, %v2283
        %v2285 = vpop.f32.mrf.mxu0
        %v2286 = vadd.f32 0.0, %v2285
        %v2287 = vpop.f32.mrf.mxu0
        %v2288 = vadd.f32 0.0, %v2287
        %v2289 = vpop.f32.mrf.mxu0
        %v2290 = vadd.f32 0.0, %v2289
        %2291 = vdwg.mxu0
        %v2292 = vadd.f32 %v1984, %v2221
        %v2293 = vadd.f32 %v1985, %v2223
        %v2294 = vadd.f32 %v1986, %v2274
        %v2295 = vadd.f32 %v1987, %v2276
        %v2296 = vadd.f32 %v1988, %v2225
        %v2297 = vadd.f32 %v1989, %v2227
        %v2298 = vadd.f32 %v1990, %v2278
        %v2299 = vadd.f32 %v1991, %v2280
        %v2300 = vadd.f32 %v1992, %v2231
        %v2301 = vadd.f32 %v1993, %v2233
        %v2302 = vadd.f32 %v1994, %v2284
        %v2303 = vadd.f32 %v1995, %v2286
        %v2304 = vadd.f32 %v1996, %v2235
        %v2305 = vadd.f32 %v1997, %v2237
        %v2306 = vadd.f32 %v1998, %v2288
        %v2307 = vadd.f32 %v1999, %v2290
        %v2308 = vmul.f32 %v2292, %v1284
        %v2309 = vmul.f32 %v2293, %v1284
        %v2310 = vmul.f32 %v2294, %v1284
        %v2311 = vmul.f32 %v2295, %v1284
        %v2312 = vmul.f32 %v2296, %v1289
        %v2313 = vmul.f32 %v2297, %v1289
        %v2314 = vmul.f32 %v2298, %v1289
        %v2315 = vmul.f32 %v2299, %v1289
        %v2316 = vmul.f32 %v2300, %v1294
        %v2317 = vmul.f32 %v2301, %v1294
        %v2318 = vmul.f32 %v2302, %v1294
        %v2319 = vmul.f32 %v2303, %v1294
        %v2320 = vmul.f32 %v2304, %v1299
        %v2321 = vmul.f32 %v2305, %v1299
        %v2322 = vmul.f32 %v2306, %v1299
        %v2323 = vmul.f32 %v2307, %v1299
        %v2324 = vadd.f32 %v2308, %v1320
        %v2325 = vadd.f32 %v2309, %v1320
        %v2326 = vadd.f32 %v2310, %v1320
        %v2327 = vadd.f32 %v2311, %v1320
        %v2328 = vadd.f32 %v2312, %v1325
        %v2329 = vadd.f32 %v2313, %v1325
        %v2330 = vadd.f32 %v2314, %v1325
        %v2331 = vadd.f32 %v2315, %v1325
        %v2332 = vadd.f32 %v2316, %v1330
        %v2333 = vadd.f32 %v2317, %v1330
        %v2334 = vadd.f32 %v2318, %v1330
        %v2335 = vadd.f32 %v2319, %v1330
        %v2336 = vadd.f32 %v2320, %v1335
        %v2337 = vadd.f32 %v2321, %v1335
        %v2338 = vadd.f32 %v2322, %v1335
        %v2339 = vadd.f32 %v2323, %v1335
        %v2340 = vmax.f32 %v2324, 0.0
        %v2341 = vmax.f32 %v2325, 0.0
        %v2342 = vmax.f32 %v2326, 0.0
        %v2343 = vmax.f32 %v2327, 0.0
        %v2344 = vmax.f32 %v2328, 0.0
        %v2345 = vmax.f32 %v2329, 0.0
        %v2346 = vmax.f32 %v2330, 0.0
        %v2347 = vmax.f32 %v2331, 0.0
        %v2348 = vmax.f32 %v2332, 0.0
        %v2349 = vmax.f32 %v2333, 0.0
        %v2350 = vmax.f32 %v2334, 0.0
        %v2351 = vmax.f32 %v2335, 0.0
        %v2352 = vmax.f32 %v2336, 0.0
        %v2353 = vmax.f32 %v2337, 0.0
        %v2354 = vmax.f32 %v2338, 0.0
        %v2355 = vmax.f32 %v2339, 0.0
        %v2356 = vpack.c.bf16 %v2344, %v2340
        %v2357 = vpack.c.bf16 %v2345, %v2341
        %v2358 = vpack.c.bf16 %v2346, %v2342
        %v2359 = vpack.c.bf16 %v2347, %v2343
        %v2360 = vpack.c.bf16 %v2352, %v2348
        %v2361 = vpack.c.bf16 %v2353, %v2349
        %v2362 = vpack.c.bf16 %v2354, %v2350
        %v2363 = vpack.c.bf16 %v2355, %v2351
        %2364 = vmatprep.subr.bf16.mxu0 0
        %2365 = vmatpush1.bf16.msra.mxu0 0
        %2366 = vmatprep.subr.bf16.mxu0 0
        %2367 = vmatpush1.bf16.msra.mxu0 0
        %2368 = vmatprep.subr.bf16.mxu0 0
        %2369 = vmatpush1.bf16.msra.mxu0 0
        %2370 = vmatprep.subr.bf16.mxu0 0
        %2371 = vmatpush1.bf16.msra.mxu0 0
        %2372 = vmatprep.subr.bf16.mxu0 0
        %2373 = vmatpush1.bf16.msra.mxu0 0
        %2374 = vmatprep.subr.bf16.mxu0 0
        %2375 = vmatpush1.bf16.msra.mxu0 0
        %2376 = vmatprep.subr.bf16.mxu0 %v2361
        %2377 = vmatpush1.bf16.msra.mxu0 %v2360
        %2378 = vmatprep.subr.bf16.mxu0 %v2357
        %2379 = vmatpush1.bf16.msra.mxu0 %v2356
        %2380 = vmatprep.subr.bf16.mxu0 0
        %2381 = vmatpush2.bf16.msra.mxu0 0
        %2382 = vmatprep.subr.bf16.mxu0 0
        %2383 = vmatpush2.bf16.msra.mxu0 0
        %2384 = vmatprep.subr.bf16.mxu0 0
        %2385 = vmatpush2.bf16.msra.mxu0 0
        %2386 = vmatprep.subr.bf16.mxu0 0
        %2387 = vmatpush2.bf16.msra.mxu0 0
        %2388 = vmatprep.subr.bf16.mxu0 0
        %2389 = vmatpush2.bf16.msra.mxu0 0
        %2390 = vmatprep.subr.bf16.mxu0 0
        %2391 = vmatpush2.bf16.msra.mxu0 0
        %2392 = vmatprep.subr.bf16.mxu0 0
        %2393 = vmatpush2.bf16.msra.mxu0 0
        %2394 = vmatprep.subr.bf16.mxu0 0
        %2395 = vmatpush2.bf16.msra.mxu0 0
        %2396 = vmatprep.mubr.bf16.mxu0 0
        %2397 = vmatmul.mubr.bf16.gmra.mxu0 %v1401
        %v2398 = vpop.f32.mrf.mxu0
        %v2399 = vadd.f32 %v1380, %v2398
        %v2400 = vpop.f32.mrf.mxu0
        %v2401 = vadd.f32 %v1380, %v2400
        %v2402 = vpop.f32.mrf.mxu0
        %v2403 = vadd.f32 %v1385, %v2402
        %v2404 = vpop.f32.mrf.mxu0
        %v2405 = vadd.f32 %v1385, %v2404
        %2406 = vmatprep.mubr.bf16.mxu0 0
        %2407 = vmatmul.mubr.bf16.gmra.mxu0 %v1404
        %v2408 = vpop.f32.mrf.mxu0
        %v2409 = vadd.f32 %v1390, %v2408
        %v2410 = vpop.f32.mrf.mxu0
        %v2411 = vadd.f32 %v1390, %v2410
        %v2412 = vpop.f32.mrf.mxu0
        %v2413 = vpop.f32.mrf.mxu0
        %2414 = vdwg.mxu0
        %2415 = vmatprep.subr.bf16.mxu0 0
        %2416 = vmatpush1.bf16.msra.mxu0 0
        %2417 = vmatprep.subr.bf16.mxu0 0
        %2418 = vmatpush1.bf16.msra.mxu0 0
        %2419 = vmatprep.subr.bf16.mxu0 0
        %2420 = vmatpush1.bf16.msra.mxu0 0
        %2421 = vmatprep.subr.bf16.mxu0 0
        %2422 = vmatpush1.bf16.msra.mxu0 0
        %2423 = vmatprep.subr.bf16.mxu0 0
        %2424 = vmatpush1.bf16.msra.mxu0 0
        %2425 = vmatprep.subr.bf16.mxu0 0
        %2426 = vmatpush1.bf16.msra.mxu0 0
        %2427 = vmatprep.subr.bf16.mxu0 %v2363
        %2428 = vmatpush1.bf16.msra.mxu0 %v2362
        %2429 = vmatprep.subr.bf16.mxu0 %v2359
        %2430 = vmatpush1.bf16.msra.mxu0 %v2358
        %2431 = vmatprep.subr.bf16.mxu0 0
        %2432 = vmatpush2.bf16.msra.mxu0 0
        %2433 = vmatprep.subr.bf16.mxu0 0
        %2434 = vmatpush2.bf16.msra.mxu0 0
        %2435 = vmatprep.subr.bf16.mxu0 0
        %2436 = vmatpush2.bf16.msra.mxu0 0
        %2437 = vmatprep.subr.bf16.mxu0 0
        %2438 = vmatpush2.bf16.msra.mxu0 0
        %2439 = vmatprep.subr.bf16.mxu0 0
        %2440 = vmatpush2.bf16.msra.mxu0 0
        %2441 = vmatprep.subr.bf16.mxu0 0
        %2442 = vmatpush2.bf16.msra.mxu0 0
        %2443 = vmatprep.subr.bf16.mxu0 0
        %2444 = vmatpush2.bf16.msra.mxu0 0
        %2445 = vmatprep.subr.bf16.mxu0 0
        %2446 = vmatpush2.bf16.msra.mxu0 0
        %2447 = vmatprep.mubr.bf16.mxu0 0
        %2448 = vmatmul.mubr.bf16.gmra.mxu0 %v1401
        %v2449 = vpop.f32.mrf.mxu0
        %v2450 = vadd.f32 %v1380, %v2449
        %v2451 = vpop.f32.mrf.mxu0
        %v2452 = vadd.f32 %v1380, %v2451
        %v2453 = vpop.f32.mrf.mxu0
        %v2454 = vadd.f32 %v1385, %v2453
        %v2455 = vpop.f32.mrf.mxu0
        %v2456 = vadd.f32 %v1385, %v2455
        %2457 = vmatprep.mubr.bf16.mxu0 0
        %2458 = vmatmul.mubr.bf16.gmra.mxu0 %v1404
        %v2459 = vpop.f32.mrf.mxu0
        %v2460 = vadd.f32 %v1390, %v2459
        %v2461 = vpop.f32.mrf.mxu0
        %v2462 = vadd.f32 %v1390, %v2461
        %v2463 = vpop.f32.mrf.mxu0
        %v2464 = vpop.f32.mrf.mxu0
        %2465 = vdwg.mxu0
        %v2466 = vpack.c.bf16 %v2403, %v2399
        %v2467 = vpack.c.bf16 %v2405, %v2401
        %v2468 = vpack.c.bf16 %v2454, %v2450
        %v2469 = vpack.c.bf16 %v2456, %v2452
        %v2470 = vpack.c.bf16 %v2409, %v2409
        %v2471 = vpack.c.bf16 %v2411, %v2411
        %v2472 = vpack.c.bf16 %v2460, %v2460
        %v2473 = vpack.c.bf16 %v2462, %v2462
        %v2482 = vunpack.c.l.b16 %v2466
        %v2483 = vunpack.c.l.b16 %v2467
        %v2484 = vunpack.c.l.b16 %v2468
        %v2485 = vunpack.c.l.b16 %v2469
        %v2486 = vunpack.c.h.b16 %v2466
        %v2487 = vunpack.c.h.b16 %v2467
        %v2488 = vunpack.c.h.b16 %v2468
        %v2489 = vunpack.c.h.b16 %v2469
        %v2490 = vunpack.c.l.b16 %v2470
        %v2491 = vunpack.c.l.b16 %v2471
        %v2492 = vunpack.c.l.b16 %v2472
        %v2493 = vunpack.c.l.b16 %v2473
        %v2494 = vpack.c.b16 %v2483, %v2482
        %v2495 = vpack.c.b16 %v2485, %v2484
        %v2496 = vpack.c.b16 %v2487, %v2486
        %v2497 = vpack.c.b16 %v2489, %v2488
        %v2498 = vpack.c.b16 %v2491, %v2490
        %v2499 = vpack.c.b16 %v2493, %v2492
        %s2506 = scalar_lea.vmem %s245, 16 [#allocation2]
        %2507 = vst [vmem:[%s2506] sm:$0xff] %v2494
        %2508 = vst [vmem:[%s2506 + $0x8] sm:$0xff] %v2495
        %2509 = vst [vmem:[%s2506 + $0x20] sm:$0xff] %v2496
        %2510 = vst [vmem:[%s2506 + $0x28] sm:$0xff] %v2497
        %2511 = vst [vmem:[%s2506 + $0x40] sm:$0x33] %v2498
        %2512 = vst [vmem:[%s2506 + $0x48] sm:$0x33] %v2499
        %s2513 = sand.u32 %s159, 1
        %s2514 = scalar_lea.sflag [#allocation3], %s2513
        %s2515 = sand.u32 %s159, 1
        %s2516 = smul.addr %s2515, 96
        %s2517 = scalar_lea.vmem [#allocation2], %s2516
        // Predicated region
        $region45: #{tpu_custom_call.1} parent=43 // pred_check
          %p2518 = pneg %p169
        $region46: #{tpu_custom_call.1} parent=43 // pred_check_branch
          %2520 = sbr.rel (%p2518) target = $region48
        $region47: #{tpu_custom_call.1} parent=43 // pred_region
          %s2521 = smul.u32 8, %s20
          %s2523 = ssub.s32 1536, 1536
          %2524 = vsyncadd %s2514, %s2523
          %s2525 = smul.addr %s2521, 64
          %s2526 = scalar_lea.hbm %s6, %s2525
          %s2527 = sshll.u32 %s2517, 4
          %s2528 = int_to_ptr.vmem [resolvable:$true] %s2527
          %2533 = dma.vmem_to_hbm [thread:$0]  %s2528, 1536, %s2526, %s2514, 512, 1024, 32
        $region48: #{tpu_custom_call.1} parent=43 // pred_fallthru
          _
      $region44: #{tpu_custom_call.1} parent=5 // pred_fallthru
        _
      %p2534 = scmp.le.s32.totalorder 2, %s15
      // Predicated region
      $region49: #{tpu_custom_call.1} parent=5 // pred_check
        %p2535 = pneg %p2534
      $region50: #{tpu_custom_call.1} parent=5 // pred_check_branch
        %2537 = sbr.rel (%p2535) target = $region52
      $region51: #{tpu_custom_call.1} parent=5 // pred_region
        %s2538 = ssub.s32 %s15, 2
        // Predicated region
        $region53: #{tpu_custom_call.1} parent=51 // pred_check
          %p2539 = pneg %p175
        $region54: #{tpu_custom_call.1} parent=51 // pred_check_branch
          %2541 = sbr.rel (%p2539) target = $region56
        $region55: #{tpu_custom_call.1} parent=51 // pred_region
          %s2542 = sand.u32 %s160, 1
          %s2543 = scalar_lea.sflag [#allocation3], %s2542
          %s2544 = sand.u32 %s160, 1
          %s2545 = smul.addr %s2544, 96
          %s2546 = scalar_lea.vmem [#allocation2], %s2545
          %2547 = dma.done %s2543, 1536
        $region56: #{tpu_custom_call.1} parent=51 // pred_fallthru
          _
      $region52: #{tpu_custom_call.1} parent=5 // pred_fallthru
        _
    $region6: #{tpu_custom_call.1} parent=1 // loop_footer
      %s19 = sadd.s32 1, %s15
    $region7: #{tpu_custom_call.1} parent=1 // loop_footer_branch
      %14 = sbr.rel target = $region3
    $region8: #{tpu_custom_call.1} parent=1 // loop_exit
      _
    %2548 = vsyncpa [#allocation3], 1
    %s2549 = scalar_lea.sflag [#allocation3], 1
    %2550 = vsyncpa %s2549, 1

</llo_original>
